<compile_context>
chip_gen: v7x
topology: tpu7x:2x2x1
jax: 0.10.0
libtpu: 0.0.40
codegen_flags: <defaults>
</compile_context>

<pallas_src>
import jax
import jax.numpy as jnp
from jax.experimental import pallas as pl
from jax.experimental.pallas import tpu as pltpu


def simple_nn_kernel(x_ref, ew1_ref, b1_ref, w2_ref, b2_ref, o_ref):
    # x_ref:  (B, D)      ew1_ref: (D, D*H)   b1_ref: (1, D*H)
    # w2_ref: (D*H, 1)    b2_ref:  (1,) SMEM  o_ref:  (B, 1)
    #
    # MXU expansion with fc1.weight folded in:
    #   z[b, d*H + h] = x[b, d] * w1[0, h]
    z = jnp.dot(x_ref[...], ew1_ref[...],
                preferred_element_type=jnp.float32,
                precision=jax.lax.Precision.HIGHEST)
    # Lane-dense VPU work on (B, D*H): add bias, ReLU.
    y = jnp.maximum(z + b1_ref[...], 0.0)
    # fc2 as an MXU matvec (no VPU multiply, no XLU reduction) + SMEM scalar bias.
    o_ref[...] = jnp.dot(y, w2_ref[...],
                         preferred_element_type=jnp.float32,
                         precision=jax.lax.Precision.HIGHEST) + b2_ref[0]


def prepare_simple_nn_params(w1, b1, w2, b2):
    """One-time layout plumbing (call once, reuse across forward calls).

    w1: (1, H) = fc1.weight.T   b1: (1, H) = fc1.bias
    w2: (D, H) with w2[d, h] == fc2.weight[0, d*H + h]
    b2: scalar-like fc2.bias
    """
    D, H = w2.shape
    DH = D * H
    # Block-diagonal expansion with fc1.weight folded in:
    #   E_w1[d, d*H + h] = w1[0, h]
    eye_expand = (jnp.arange(D, dtype=jnp.int32)[:, None]
                  == (jnp.arange(DH, dtype=jnp.int32) // H)[None, :]
                  ).astype(jnp.float32)                       # (D, DH) 0/1
    e_w1 = eye_expand * jnp.tile(w1, (1, D))                  # (D, DH)
    b1f = jnp.tile(b1, (1, D))                                # (1, DH)
    w2col = w2.reshape(DH, 1)                                 # (DH, 1)
    b2s = jnp.asarray(b2, jnp.float32).reshape(1)             # (1,) for SMEM
    return e_w1, b1f, w2col, b2s


@jax.jit
def simple_nn_forward(x, e_w1, b1f, w2col, b2s):
    """x: (B, D) float32; prepared params from prepare_simple_nn_params.
    Returns (B, 1) float32."""
    B = x.shape[0]
    return pl.pallas_call(
        simple_nn_kernel,
        out_shape=jax.ShapeDtypeStruct((B, 1), jnp.float32),
        in_specs=[
            pl.BlockSpec(memory_space=pltpu.MemorySpace.VMEM),   # x
            pl.BlockSpec(memory_space=pltpu.MemorySpace.VMEM),   # E_w1
            pl.BlockSpec(memory_space=pltpu.MemorySpace.VMEM),   # b1 (tiled)
            pl.BlockSpec(memory_space=pltpu.MemorySpace.VMEM),   # w2 column
            pl.BlockSpec(memory_space=pltpu.MemorySpace.SMEM),   # b2 scalar
        ],
        out_specs=pl.BlockSpec(memory_space=pltpu.MemorySpace.VMEM),
    )(x, e_w1, b1f, w2col, b2s)


def reference_forward(x, w1, b1, w2, b2):
    # Pure-JAX replica of the PyTorch forward pass.
    B, D = x.shape
    H = w1.shape[1]
    xf = x.reshape(-1, 1)                      # (B*D, 1)
    y = jnp.maximum(xf @ w1 + b1, 0.0)         # (B*D, H)
    y = y.reshape(B, D * H)                    # (B, D*H)  -> matches torch .view(b, -1)
    w2_flat = w2.reshape(1, D * H)             # fc2.weight
    return y @ w2_flat.T + jnp.asarray(b2, jnp.float32).reshape(1, 1)


if __name__ == "__main__":
    B, D, H = 4, 16, 32  # batch, input_dim, hidden_dim

    key = jax.random.PRNGKey(0)
    kx, k1, k2, k3, k4 = jax.random.split(key, 5)

    x = jax.random.normal(kx, (B, D), dtype=jnp.float32)

    # Deterministic "PyTorch-like" uniform inits (fan_in based bounds).
    bound1 = 1.0  # fc1 fan_in = 1
    w1 = jax.random.uniform(k1, (1, H), jnp.float32, -bound1, bound1)   # fc1.weight.T
    b1 = jax.random.uniform(k2, (1, H), jnp.float32, -bound1, bound1)   # fc1.bias
    bound2 = 1.0 / jnp.sqrt(D * H)  # fc2 fan_in = D*H
    w2 = jax.random.uniform(k3, (D, H), jnp.float32, -bound2, bound2)   # fc2.weight reshaped (D, H)
    b2 = jax.random.uniform(k4, (1, 1), jnp.float32, -bound2, bound2)   # fc2.bias

    # One-time parameter preparation (hoisted out of the per-call path).
    e_w1, b1f, w2col, b2s = prepare_simple_nn_params(w1, b1, w2, b2)
    e_w1, b1f, w2col, b2s = jax.block_until_ready((e_w1, b1f, w2col, b2s))

    out = simple_nn_forward(x, e_w1, b1f, w2col, b2s)
    out = jax.block_until_ready(out)

    ref = reference_forward(x, w1, b1, w2, b2)
    assert out.shape == (B, 1)
    assert jnp.allclose(out, ref, atol=1e-5, rtol=1e-5), (out, ref)

    print("KERNEL_OK")
</pallas_src>

<mosaic_0001>
module attributes {stable_mosaic.version = 11 : i64} {
  func.func @simple_nn_kernel(%arg0: memref<4x16xf32, #tpu.memory_space<vmem>>, %arg1: memref<16x512xf32, #tpu.memory_space<vmem>>, %arg2: memref<1x512xf32, #tpu.memory_space<vmem>>, %arg3: memref<512x1xf32, #tpu.memory_space<vmem>>, %arg4: memref<1xf32, #tpu.memory_space<smem>>, %arg5: memref<4x1xf32, #tpu.memory_space<vmem>>) attributes {dimension_semantics = [], scalar_prefetch = 0 : i64, scratch_operands = 0 : i64, tpu.core_type = #tpu.core_type<tc>} {
    %c0 = arith.constant 0 : index
    %c0_0 = arith.constant 0 : index
    %0 = vector.load %arg0[%c0, %c0_0] : memref<4x16xf32, #tpu.memory_space<vmem>>, vector<4x16xf32>
    %c0_1 = arith.constant 0 : index
    %c0_2 = arith.constant 0 : index
    %1 = vector.load %arg1[%c0_1, %c0_2] : memref<16x512xf32, #tpu.memory_space<vmem>>, vector<16x512xf32>
    %cst = arith.constant dense<0.000000e+00> : vector<4x512xf32>
    %2 = tpu.matmul %0, %1, %cst {dimension_numbers = #tpu.dot_dimension_numbers<[1], [0], [0], [1], [0, 0, 1, 1], [], []>, precision = #tpu.contract_precision<fp32>} : vector<4x16xf32>, vector<16x512xf32>, vector<4x512xf32> -> vector<4x512xf32>
    %c0_3 = arith.constant 0 : index
    %c0_4 = arith.constant 0 : index
    %3 = vector.load %arg2[%c0_3, %c0_4] : memref<1x512xf32, #tpu.memory_space<vmem>>, vector<1x512xf32>
    %4 = vector.broadcast %3 : vector<1x512xf32> to vector<4x512xf32>
    %5 = arith.addf %2, %4 : vector<4x512xf32>
    %cst_5 = arith.constant 0.000000e+00 : f32
    %6 = vector.broadcast %cst_5 : f32 to vector<4x512xf32>
    %7 = arith.maximumf %5, %6 : vector<4x512xf32>
    %c0_6 = arith.constant 0 : index
    %c0_7 = arith.constant 0 : index
    %8 = vector.load %arg3[%c0_6, %c0_7] : memref<512x1xf32, #tpu.memory_space<vmem>>, vector<512x1xf32>
    %cst_8 = arith.constant dense<0.000000e+00> : vector<4x1xf32>
    %9 = tpu.matmul %7, %8, %cst_8 {dimension_numbers = #tpu.dot_dimension_numbers<[1], [0], [0], [1], [0, 0, 1, 1], [], []>, precision = #tpu.contract_precision<fp32>} : vector<4x512xf32>, vector<512x1xf32>, vector<4x1xf32> -> vector<4x1xf32>
    %c0_9 = arith.constant 0 : index
    %10 = memref.load %arg4[%c0_9] : memref<1xf32, #tpu.memory_space<smem>>
    %11 = vector.broadcast %10 : f32 to vector<4x1xf32>
    %12 = arith.addf %9, %11 : vector<4x1xf32>
    %c0_10 = arith.constant 0 : index
    %c0_11 = arith.constant 0 : index
    %13 = vector.load %arg5[%c0_10, %c0_11] : memref<4x1xf32, #tpu.memory_space<vmem>>, vector<4x1xf32>
    tpu.vector_store %arg5[%c0_10, %c0_11], %12 {strides = array<i32>} : memref<4x1xf32, #tpu.memory_space<vmem>>, vector<4x1xf32>,
    return
  }
}

</mosaic_0001>

<llo_original>
// kernel: simple_nn_forward.1
$region0: #{simple_nn_forward.1}
  #allocation0 [shape = 'u32[]', space=smem, size = 0x4, offset = 0x4, fixed_abs, tag = 'smem constant byte address 0x4 - core index']
  #allocation1 [shape = 'u32[144,128]{1,0:T(1,128)}', space=vmem, size = 0x12000, scoped, tag = 'internal scratch']
  #allocation2 [shape = 'f32[1]{0:T(128)S(6)}', space=smem, size = 0x200, scoped, tag = 'scoped memory for simple_nn_forward.1']
  %s0 = inlined_call_operand.vmem [shape: f32[4,16], index: 0, kind: input, shape index: {}]
  %s1 = inlined_call_operand.vmem [shape: f32[16,512], index: 1, kind: input, shape index: {}]
  %s2 = inlined_call_operand.vmem [shape: f32[1,512], index: 2, kind: input, shape index: {}]
  %s3 = inlined_call_operand.vmem [shape: f32[512,1], index: 3, kind: input, shape index: {}]
  %s4 = inlined_call_operand.<no memory space> [shape: f32[1], index: 4, kind: input, shape index: {}]
  %s5 = inlined_call_operand.vmem [shape: f32[4,1], index: 5, kind: output, shape index: {}]
  %s6 = sld [smem:[#allocation0]]
  $region30: #{simple_nn_forward.1} parent=0
    _
  %s8 = ssub.s32 1, %s6
  %s9 = scalar_select 0, %s8, %s6
  %10 = sst [smem:[#allocation2]] %s4
  // Predicated region
  $region2: #{simple_nn_forward.1} parent=0 // pred_check
    _
  $region3: #{simple_nn_forward.1} parent=0 // pred_check_branch
    %12 = sbr.rel (0) target = $region5
  $region4: #{simple_nn_forward.1} parent=0 // pred_region
    _
  $region5: #{simple_nn_forward.1} parent=0 // pred_fallthru
    _
  // Predicated region
  $region6: #{simple_nn_forward.1} parent=0 // pred_check
    _
  $region7: #{simple_nn_forward.1} parent=0 // pred_check_branch
    %14 = sbr.rel (0) target = $region9
  $region8: #{simple_nn_forward.1} parent=0 // pred_region
    _
  $region9: #{simple_nn_forward.1} parent=0 // pred_fallthru
    _
  // Predicated region
  $region10: #{simple_nn_forward.1} parent=0 // pred_check
    _
  $region11: #{simple_nn_forward.1} parent=0 // pred_check_branch
    %16 = sbr.rel (0) target = $region13
  $region12: #{simple_nn_forward.1} parent=0 // pred_region
    _
  $region13: #{simple_nn_forward.1} parent=0 // pred_fallthru
    _
  // Predicated region
  $region14: #{simple_nn_forward.1} parent=0 // pred_check
    _
  $region15: #{simple_nn_forward.1} parent=0 // pred_check_branch
    %18 = sbr.rel (0) target = $region17
  $region16: #{simple_nn_forward.1} parent=0 // pred_region
    _
  $region17: #{simple_nn_forward.1} parent=0 // pred_fallthru
    _
  // Predicated region
  $region18: #{simple_nn_forward.1} parent=0 // pred_check
    _
  $region19: #{simple_nn_forward.1} parent=0 // pred_check_branch
    %20 = sbr.rel (0) target = $region21
  $region20: #{simple_nn_forward.1} parent=0 // pred_region
    _
  $region21: #{simple_nn_forward.1} parent=0 // pred_fallthru
    _
  %v21 = vld [vmem:[%s0] sm:$0xf]
  %v22 = vld [vmem:[%s1] sm:$0xff]
  %v23 = vld [vmem:[%s1 + $0x8] sm:$0xff]
  %v24 = vld [vmem:[%s1 + $0x10] sm:$0xff]
  %v25 = vld [vmem:[%s1 + $0x18] sm:$0xff]
  %v26 = vld [vmem:[%s1 + $0x20] sm:$0xff]
  %v27 = vld [vmem:[%s1 + $0x28] sm:$0xff]
  %v28 = vld [vmem:[%s1 + $0x30] sm:$0xff]
  %v29 = vld [vmem:[%s1 + $0x38] sm:$0xff]
  %v30 = vld [vmem:[%s2] sm:$0xf]
  %v32 = vlaneseq
  %v33 = vshrl.u32 %v32, 7
  %v34 = vsub.s32 0, %v33
  %v35 = vrot.slane %v30, %v34
  %v36 = vlaneseq
  %v37 = vshrl.u32 %v36, 7
  %v38 = vsub.s32 1, %v37
  %v39 = vrot.slane %v30, %v38
  %v40 = vlaneseq
  %v41 = vshrl.u32 %v40, 7
  %v42 = vsub.s32 2, %v41
  %v43 = vrot.slane %v30, %v42
  %v44 = vlaneseq
  %v45 = vshrl.u32 %v44, 7
  %v46 = vsub.s32 3, %v45
  %v47 = vrot.slane %v30, %v46
  %vm52 = vcmask 130048
  %v54 = vsel %vm52, %v21, 0
  %v56 = vand.u32 %v23, 4294901760
  %57 = vmatprep.subr.mxu0 %v56
  %v58 = vand.u32 %v22, 4294901760
  %59 = vmatpush1.msra.mxu0 %v58
  %v60 = vand.u32 %v27, 4294901760
  %61 = vmatprep.subr.mxu0 %v60
  %v62 = vand.u32 %v26, 4294901760
  %63 = vmatpush1.msra.mxu0 %v62
  %64 = vmatprep.subr.mxu0 0.0
  %65 = vmatpush1.msra.mxu0 0.0
  %66 = vmatprep.subr.mxu0 0.0
  %67 = vmatpush1.msra.mxu0 0.0
  %68 = vmatprep.subr.mxu0 0.0
  %69 = vmatpush1.msra.mxu0 0.0
  %70 = vmatprep.subr.mxu0 0.0
  %71 = vmatpush1.msra.mxu0 0.0
  %72 = vmatprep.subr.mxu0 0.0
  %73 = vmatpush1.msra.mxu0 0.0
  %74 = vmatprep.subr.mxu0 0.0
  %75 = vmatpush1.msra.mxu0 0.0
  %76 = vmatprep.subr.mxu0 0.0
  %77 = vmatpush1.msra.mxu0 0.0
  %78 = vmatprep.subr.mxu0 0.0
  %79 = vmatpush1.msra.mxu0 0.0
  %80 = vmatprep.subr.mxu0 0.0
  %81 = vmatpush1.msra.mxu0 0.0
  %82 = vmatprep.subr.mxu0 0.0
  %83 = vmatpush1.msra.mxu0 0.0
  %84 = vmatprep.subr.mxu0 0.0
  %85 = vmatpush1.msra.mxu0 0.0
  %86 = vmatprep.subr.mxu0 0.0
  %87 = vmatpush1.msra.mxu0 0.0
  %88 = vmatprep.subr.mxu0 0.0
  %89 = vmatpush1.msra.mxu0 0.0
  %90 = vmatprep.subr.mxu0 0.0
  %91 = vmatpush1.msra.mxu0 0.0
  %92 = vmatprep.subr.mxu0 0.0
  %93 = vmatpush1.msra.mxu0 0.0
  %94 = vmatprep.subr.mxu0 0.0
  %95 = vmatpush1.msra.mxu0 0.0
  %96 = vmatprep.subr.mxu0 0.0
  %97 = vmatpush1.msra.mxu0 0.0
  %98 = vmatprep.subr.mxu0 0.0
  %99 = vmatpush1.msra.mxu0 0.0
  %100 = vmatprep.subr.mxu0 0.0
  %101 = vmatpush1.msra.mxu0 0.0
  %102 = vmatprep.subr.mxu0 0.0
  %103 = vmatpush1.msra.mxu0 0.0
  %104 = vmatprep.subr.mxu0 0.0
  %105 = vmatpush1.msra.mxu0 0.0
  %106 = vmatprep.subr.mxu0 0.0
  %107 = vmatpush1.msra.mxu0 0.0
  %108 = vmatprep.subr.mxu0 0.0
  %109 = vmatpush1.msra.mxu0 0.0
  %110 = vmatprep.subr.mxu0 0.0
  %111 = vmatpush1.msra.mxu0 0.0
  %112 = vmatprep.subr.mxu0 0.0
  %113 = vmatpush1.msra.mxu0 0.0
  %114 = vmatprep.subr.mxu0 0.0
  %115 = vmatpush1.msra.mxu0 0.0
  %116 = vmatprep.subr.mxu0 0.0
  %117 = vmatpush1.msra.mxu0 0.0
  %118 = vmatprep.subr.mxu0 0.0
  %119 = vmatpush1.msra.mxu0 0.0
  %120 = vmatprep.subr.mxu0 0.0
  %121 = vmatpush1.msra.mxu0 0.0
  %122 = vmatprep.subr.mxu0 0.0
  %123 = vmatpush1.msra.mxu0 0.0
  %124 = vmatprep.mubr.f32.mxu0 0.0
  %v125 = vand.u32 %v54, 4294901760
  %v126 = vsub.f32 %v54, %v125
  %v127 = vand.u32 %v126, 4294901760
  %v128 = vsub.f32 %v126, %v127
  %v129 = vand.u32 %v128, 4294901760
  %130 = vmatmul.mubr.f32.gmra.mrb[0].mxu0 %v129
  %v131 = vpop.f32.mrb[0].mxu0
  %v132 = vadd.f32 %v35, %v131
  %v133 = vpop.f32.mrb[0].mxu0
  %v134 = vadd.f32 %v39, %v133
  %135 = vdwg.mxu0
  %v136 = vand.u32 %v23, 4294901760
  %v137 = vsub.f32 %v23, %v136
  %v138 = vand.u32 %v137, 4294901760
  %v139 = vsub.f32 %v137, %v138
  %v140 = vand.u32 %v139, 4294901760
  %141 = vmatprep.subr.mxu0 %v140
  %v142 = vand.u32 %v22, 4294901760
  %v143 = vsub.f32 %v22, %v142
  %v144 = vand.u32 %v143, 4294901760
  %v145 = vsub.f32 %v143, %v144
  %v146 = vand.u32 %v145, 4294901760
  %147 = vmatpush1.msra.mxu0 %v146
  %v148 = vand.u32 %v27, 4294901760
  %v149 = vsub.f32 %v27, %v148
  %v150 = vand.u32 %v149, 4294901760
  %v151 = vsub.f32 %v149, %v150
  %v152 = vand.u32 %v151, 4294901760
  %153 = vmatprep.subr.mxu0 %v152
  %v154 = vand.u32 %v26, 4294901760
  %v155 = vsub.f32 %v26, %v154
  %v156 = vand.u32 %v155, 4294901760
  %v157 = vsub.f32 %v155, %v156
  %v158 = vand.u32 %v157, 4294901760
  %159 = vmatpush1.msra.mxu0 %v158
  %160 = vmatprep.subr.mxu0 0.0
  %161 = vmatpush1.msra.mxu0 0.0
  %162 = vmatprep.subr.mxu0 0.0
  %163 = vmatpush1.msra.mxu0 0.0
  %164 = vmatprep.subr.mxu0 0.0
  %165 = vmatpush1.msra.mxu0 0.0
  %166 = vmatprep.subr.mxu0 0.0
  %167 = vmatpush1.msra.mxu0 0.0
  %168 = vmatprep.subr.mxu0 0.0
  %169 = vmatpush1.msra.mxu0 0.0
  %170 = vmatprep.subr.mxu0 0.0
  %171 = vmatpush1.msra.mxu0 0.0
  %172 = vmatprep.subr.mxu0 0.0
  %173 = vmatpush1.msra.mxu0 0.0
  %174 = vmatprep.subr.mxu0 0.0
  %175 = vmatpush1.msra.mxu0 0.0
  %176 = vmatprep.subr.mxu0 0.0
  %177 = vmatpush1.msra.mxu0 0.0
  %178 = vmatprep.subr.mxu0 0.0
  %179 = vmatpush1.msra.mxu0 0.0
  %180 = vmatprep.subr.mxu0 0.0
  %181 = vmatpush1.msra.mxu0 0.0
  %182 = vmatprep.subr.mxu0 0.0
  %183 = vmatpush1.msra.mxu0 0.0
  %184 = vmatprep.subr.mxu0 0.0
  %185 = vmatpush1.msra.mxu0 0.0
  %186 = vmatprep.subr.mxu0 0.0
  %187 = vmatpush1.msra.mxu0 0.0
  %188 = vmatprep.subr.mxu0 0.0
  %189 = vmatpush1.msra.mxu0 0.0
  %190 = vmatprep.subr.mxu0 0.0
  %191 = vmatpush1.msra.mxu0 0.0
  %192 = vmatprep.subr.mxu0 0.0
  %193 = vmatpush1.msra.mxu0 0.0
  %194 = vmatprep.subr.mxu0 0.0
  %195 = vmatpush1.msra.mxu0 0.0
  %196 = vmatprep.subr.mxu0 0.0
  %197 = vmatpush1.msra.mxu0 0.0
  %198 = vmatprep.subr.mxu0 0.0
  %199 = vmatpush1.msra.mxu0 0.0
  %200 = vmatprep.subr.mxu0 0.0
  %201 = vmatpush1.msra.mxu0 0.0
  %202 = vmatprep.subr.mxu0 0.0
  %203 = vmatpush1.msra.mxu0 0.0
  %204 = vmatprep.subr.mxu0 0.0
  %205 = vmatpush1.msra.mxu0 0.0
  %206 = vmatprep.subr.mxu0 0.0
  %207 = vmatpush1.msra.mxu0 0.0
  %208 = vmatprep.subr.mxu0 0.0
  %209 = vmatpush1.msra.mxu0 0.0
  %210 = vmatprep.subr.mxu0 0.0
  %211 = vmatpush1.msra.mxu0 0.0
  %212 = vmatprep.subr.mxu0 0.0
  %213 = vmatpush1.msra.mxu0 0.0
  %214 = vmatprep.subr.mxu0 0.0
  %215 = vmatpush1.msra.mxu0 0.0
  %216 = vmatprep.subr.mxu0 0.0
  %217 = vmatpush1.msra.mxu0 0.0
  %218 = vmatprep.subr.mxu0 0.0
  %219 = vmatpush1.msra.mxu0 0.0
  %220 = vmatprep.mubr.f32.mxu0 0.0
  %v221 = vand.u32 %v54, 4294901760
  %222 = vmatmul.mubr.f32.gmra.mrb[0].mxu0 %v221
  %v223 = vpop.f32.mrb[0].mxu0
  %v224 = vadd.f32 %v132, %v223
  %v225 = vpop.f32.mrb[0].mxu0
  %v226 = vadd.f32 %v134, %v225
  %227 = vdwg.mxu0
  %v228 = vand.u32 %v23, 4294901760
  %v229 = vsub.f32 %v23, %v228
  %230 = vmatprep.subr.mxu0 %v229
  %v231 = vand.u32 %v22, 4294901760
  %v232 = vsub.f32 %v22, %v231
  %233 = vmatpush1.msra.mxu0 %v232
  %v234 = vand.u32 %v27, 4294901760
  %v235 = vsub.f32 %v27, %v234
  %236 = vmatprep.subr.mxu0 %v235
  %v237 = vand.u32 %v26, 4294901760
  %v238 = vsub.f32 %v26, %v237
  %239 = vmatpush1.msra.mxu0 %v238
  %240 = vmatprep.subr.mxu0 0.0
  %241 = vmatpush1.msra.mxu0 0.0
  %242 = vmatprep.subr.mxu0 0.0
  %243 = vmatpush1.msra.mxu0 0.0
  %244 = vmatprep.subr.mxu0 0.0
  %245 = vmatpush1.msra.mxu0 0.0
  %246 = vmatprep.subr.mxu0 0.0
  %247 = vmatpush1.msra.mxu0 0.0
  %248 = vmatprep.subr.mxu0 0.0
  %249 = vmatpush1.msra.mxu0 0.0
  %250 = vmatprep.subr.mxu0 0.0
  %251 = vmatpush1.msra.mxu0 0.0
  %252 = vmatprep.subr.mxu0 0.0
  %253 = vmatpush1.msra.mxu0 0.0
  %254 = vmatprep.subr.mxu0 0.0
  %255 = vmatpush1.msra.mxu0 0.0
  %256 = vmatprep.subr.mxu0 0.0
  %257 = vmatpush1.msra.mxu0 0.0
  %258 = vmatprep.subr.mxu0 0.0
  %259 = vmatpush1.msra.mxu0 0.0
  %260 = vmatprep.subr.mxu0 0.0
  %261 = vmatpush1.msra.mxu0 0.0
  %262 = vmatprep.subr.mxu0 0.0
  %263 = vmatpush1.msra.mxu0 0.0
  %264 = vmatprep.subr.mxu0 0.0
  %265 = vmatpush1.msra.mxu0 0.0
  %266 = vmatprep.subr.mxu0 0.0
  %267 = vmatpush1.msra.mxu0 0.0
  %268 = vmatprep.subr.mxu0 0.0
  %269 = vmatpush1.msra.mxu0 0.0
  %270 = vmatprep.subr.mxu0 0.0
  %271 = vmatpush1.msra.mxu0 0.0
  %272 = vmatprep.subr.mxu0 0.0
  %273 = vmatpush1.msra.mxu0 0.0
  %274 = vmatprep.subr.mxu0 0.0
  %275 = vmatpush1.msra.mxu0 0.0
  %276 = vmatprep.subr.mxu0 0.0
  %277 = vmatpush1.msra.mxu0 0.0
  %278 = vmatprep.subr.mxu0 0.0
  %279 = vmatpush1.msra.mxu0 0.0
  %280 = vmatprep.subr.mxu0 0.0
  %281 = vmatpush1.msra.mxu0 0.0
  %282 = vmatprep.subr.mxu0 0.0
  %283 = vmatpush1.msra.mxu0 0.0
  %284 = vmatprep.subr.mxu0 0.0
  %285 = vmatpush1.msra.mxu0 0.0
  %286 = vmatprep.subr.mxu0 0.0
  %287 = vmatpush1.msra.mxu0 0.0
  %288 = vmatprep.subr.mxu0 0.0
  %289 = vmatpush1.msra.mxu0 0.0
  %290 = vmatprep.subr.mxu0 0.0
  %291 = vmatpush1.msra.mxu0 0.0
  %292 = vmatprep.subr.mxu0 0.0
  %293 = vmatpush1.msra.mxu0 0.0
  %294 = vmatprep.subr.mxu0 0.0
  %295 = vmatpush1.msra.mxu0 0.0
  %296 = vmatprep.subr.mxu0 0.0
  %297 = vmatpush1.msra.mxu0 0.0
  %298 = vmatprep.subr.mxu0 0.0
  %299 = vmatpush1.msra.mxu0 0.0
  %300 = vmatprep.mubr.f32.mxu0 0.0
  %v301 = vand.u32 %v54, 4294901760
  %v302 = vsub.f32 %v54, %v301
  %303 = vmatmul.mubr.f32.gmra.mrb[0].mxu0 %v302
  %v304 = vpop.f32.mrb[0].mxu0
  %v305 = vadd.f32 %v224, %v304
  %v306 = vpop.f32.mrb[0].mxu0
  %v307 = vadd.f32 %v226, %v306
  %308 = vdwg.mxu0
  %v309 = vand.u32 %v23, 4294901760
  %310 = vmatprep.subr.mxu0 %v309
  %v311 = vand.u32 %v22, 4294901760
  %312 = vmatpush1.msra.mxu0 %v311
  %v313 = vand.u32 %v27, 4294901760
  %314 = vmatprep.subr.mxu0 %v313
  %v315 = vand.u32 %v26, 4294901760
  %316 = vmatpush1.msra.mxu0 %v315
  %317 = vmatprep.subr.mxu0 0.0
  %318 = vmatpush1.msra.mxu0 0.0
  %319 = vmatprep.subr.mxu0 0.0
  %320 = vmatpush1.msra.mxu0 0.0
  %321 = vmatprep.subr.mxu0 0.0
  %322 = vmatpush1.msra.mxu0 0.0
  %323 = vmatprep.subr.mxu0 0.0
  %324 = vmatpush1.msra.mxu0 0.0
  %325 = vmatprep.subr.mxu0 0.0
  %326 = vmatpush1.msra.mxu0 0.0
  %327 = vmatprep.subr.mxu0 0.0
  %328 = vmatpush1.msra.mxu0 0.0
  %329 = vmatprep.subr.mxu0 0.0
  %330 = vmatpush1.msra.mxu0 0.0
  %331 = vmatprep.subr.mxu0 0.0
  %332 = vmatpush1.msra.mxu0 0.0
  %333 = vmatprep.subr.mxu0 0.0
  %334 = vmatpush1.msra.mxu0 0.0
  %335 = vmatprep.subr.mxu0 0.0
  %336 = vmatpush1.msra.mxu0 0.0
  %337 = vmatprep.subr.mxu0 0.0
  %338 = vmatpush1.msra.mxu0 0.0
  %339 = vmatprep.subr.mxu0 0.0
  %340 = vmatpush1.msra.mxu0 0.0
  %341 = vmatprep.subr.mxu0 0.0
  %342 = vmatpush1.msra.mxu0 0.0
  %343 = vmatprep.subr.mxu0 0.0
  %344 = vmatpush1.msra.mxu0 0.0
  %345 = vmatprep.subr.mxu0 0.0
  %346 = vmatpush1.msra.mxu0 0.0
  %347 = vmatprep.subr.mxu0 0.0
  %348 = vmatpush1.msra.mxu0 0.0
  %349 = vmatprep.subr.mxu0 0.0
  %350 = vmatpush1.msra.mxu0 0.0
  %351 = vmatprep.subr.mxu0 0.0
  %352 = vmatpush1.msra.mxu0 0.0
  %353 = vmatprep.subr.mxu0 0.0
  %354 = vmatpush1.msra.mxu0 0.0
  %355 = vmatprep.subr.mxu0 0.0
  %356 = vmatpush1.msra.mxu0 0.0
  %357 = vmatprep.subr.mxu0 0.0
  %358 = vmatpush1.msra.mxu0 0.0
  %359 = vmatprep.subr.mxu0 0.0
  %360 = vmatpush1.msra.mxu0 0.0
  %361 = vmatprep.subr.mxu0 0.0
  %362 = vmatpush1.msra.mxu0 0.0
  %363 = vmatprep.subr.mxu0 0.0
  %364 = vmatpush1.msra.mxu0 0.0
  %365 = vmatprep.subr.mxu0 0.0
  %366 = vmatpush1.msra.mxu0 0.0
  %367 = vmatprep.subr.mxu0 0.0
  %368 = vmatpush1.msra.mxu0 0.0
  %369 = vmatprep.subr.mxu0 0.0
  %370 = vmatpush1.msra.mxu0 0.0
  %371 = vmatprep.subr.mxu0 0.0
  %372 = vmatpush1.msra.mxu0 0.0
  %373 = vmatprep.subr.mxu0 0.0
  %374 = vmatpush1.msra.mxu0 0.0
  %375 = vmatprep.subr.mxu0 0.0
  %376 = vmatpush1.msra.mxu0 0.0
  %377 = vmatprep.mubr.f32.mxu0 0.0
  %v378 = vand.u32 %v54, 4294901760
  %v379 = vsub.f32 %v54, %v378
  %v380 = vand.u32 %v379, 4294901760
  %381 = vmatmul.mubr.f32.gmra.mrb[0].mxu0 %v380
  %v382 = vpop.f32.mrb[0].mxu0
  %v383 = vadd.f32 %v305, %v382
  %v384 = vpop.f32.mrb[0].mxu0
  %v385 = vadd.f32 %v307, %v384
  %386 = vdwg.mxu0
  %v387 = vand.u32 %v23, 4294901760
  %v388 = vsub.f32 %v23, %v387
  %v389 = vand.u32 %v388, 4294901760
  %390 = vmatprep.subr.mxu0 %v389
  %v391 = vand.u32 %v22, 4294901760
  %v392 = vsub.f32 %v22, %v391
  %v393 = vand.u32 %v392, 4294901760
  %394 = vmatpush1.msra.mxu0 %v393
  %v395 = vand.u32 %v27, 4294901760
  %v396 = vsub.f32 %v27, %v395
  %v397 = vand.u32 %v396, 4294901760
  %398 = vmatprep.subr.mxu0 %v397
  %v399 = vand.u32 %v26, 4294901760
  %v400 = vsub.f32 %v26, %v399
  %v401 = vand.u32 %v400, 4294901760
  %402 = vmatpush1.msra.mxu0 %v401
  %403 = vmatprep.subr.mxu0 0.0
  %404 = vmatpush1.msra.mxu0 0.0
  %405 = vmatprep.subr.mxu0 0.0
  %406 = vmatpush1.msra.mxu0 0.0
  %407 = vmatprep.subr.mxu0 0.0
  %408 = vmatpush1.msra.mxu0 0.0
  %409 = vmatprep.subr.mxu0 0.0
  %410 = vmatpush1.msra.mxu0 0.0
  %411 = vmatprep.subr.mxu0 0.0
  %412 = vmatpush1.msra.mxu0 0.0
  %413 = vmatprep.subr.mxu0 0.0
  %414 = vmatpush1.msra.mxu0 0.0
  %415 = vmatprep.subr.mxu0 0.0
  %416 = vmatpush1.msra.mxu0 0.0
  %417 = vmatprep.subr.mxu0 0.0
  %418 = vmatpush1.msra.mxu0 0.0
  %419 = vmatprep.subr.mxu0 0.0
  %420 = vmatpush1.msra.mxu0 0.0
  %421 = vmatprep.subr.mxu0 0.0
  %422 = vmatpush1.msra.mxu0 0.0
  %423 = vmatprep.subr.mxu0 0.0
  %424 = vmatpush1.msra.mxu0 0.0
  %425 = vmatprep.subr.mxu0 0.0
  %426 = vmatpush1.msra.mxu0 0.0
  %427 = vmatprep.subr.mxu0 0.0
  %428 = vmatpush1.msra.mxu0 0.0
  %429 = vmatprep.subr.mxu0 0.0
  %430 = vmatpush1.msra.mxu0 0.0
  %431 = vmatprep.subr.mxu0 0.0
  %432 = vmatpush1.msra.mxu0 0.0
  %433 = vmatprep.subr.mxu0 0.0
  %434 = vmatpush1.msra.mxu0 0.0
  %435 = vmatprep.subr.mxu0 0.0
  %436 = vmatpush1.msra.mxu0 0.0
  %437 = vmatprep.subr.mxu0 0.0
  %438 = vmatpush1.msra.mxu0 0.0
  %439 = vmatprep.subr.mxu0 0.0
  %440 = vmatpush1.msra.mxu0 0.0
  %441 = vmatprep.subr.mxu0 0.0
  %442 = vmatpush1.msra.mxu0 0.0
  %443 = vmatprep.subr.mxu0 0.0
  %444 = vmatpush1.msra.mxu0 0.0
  %445 = vmatprep.subr.mxu0 0.0
  %446 = vmatpush1.msra.mxu0 0.0
  %447 = vmatprep.subr.mxu0 0.0
  %448 = vmatpush1.msra.mxu0 0.0
  %449 = vmatprep.subr.mxu0 0.0
  %450 = vmatpush1.msra.mxu0 0.0
  %451 = vmatprep.subr.mxu0 0.0
  %452 = vmatpush1.msra.mxu0 0.0
  %453 = vmatprep.subr.mxu0 0.0
  %454 = vmatpush1.msra.mxu0 0.0
  %455 = vmatprep.subr.mxu0 0.0
  %456 = vmatpush1.msra.mxu0 0.0
  %457 = vmatprep.subr.mxu0 0.0
  %458 = vmatpush1.msra.mxu0 0.0
  %459 = vmatprep.subr.mxu0 0.0
  %460 = vmatpush1.msra.mxu0 0.0
  %461 = vmatprep.subr.mxu0 0.0
  %462 = vmatpush1.msra.mxu0 0.0
  %463 = vmatprep.mubr.f32.mxu0 0.0
  %v464 = vand.u32 %v54, 4294901760
  %465 = vmatmul.mubr.f32.gmra.mrb[0].mxu0 %v464
  %v466 = vpop.f32.mrb[0].mxu0
  %v467 = vadd.f32 %v383, %v466
  %v468 = vpop.f32.mrb[0].mxu0
  %v469 = vadd.f32 %v385, %v468
  %470 = vdwg.mxu0
  %v471 = vand.u32 %v23, 4294901760
  %472 = vmatprep.subr.mxu0 %v471
  %v473 = vand.u32 %v22, 4294901760
  %474 = vmatpush1.msra.mxu0 %v473
  %v475 = vand.u32 %v27, 4294901760
  %476 = vmatprep.subr.mxu0 %v475
  %v477 = vand.u32 %v26, 4294901760
  %478 = vmatpush1.msra.mxu0 %v477
  %479 = vmatprep.subr.mxu0 0.0
  %480 = vmatpush1.msra.mxu0 0.0
  %481 = vmatprep.subr.mxu0 0.0
  %482 = vmatpush1.msra.mxu0 0.0
  %483 = vmatprep.subr.mxu0 0.0
  %484 = vmatpush1.msra.mxu0 0.0
  %485 = vmatprep.subr.mxu0 0.0
  %486 = vmatpush1.msra.mxu0 0.0
  %487 = vmatprep.subr.mxu0 0.0
  %488 = vmatpush1.msra.mxu0 0.0
  %489 = vmatprep.subr.mxu0 0.0
  %490 = vmatpush1.msra.mxu0 0.0
  %491 = vmatprep.subr.mxu0 0.0
  %492 = vmatpush1.msra.mxu0 0.0
  %493 = vmatprep.subr.mxu0 0.0
  %494 = vmatpush1.msra.mxu0 0.0
  %495 = vmatprep.subr.mxu0 0.0
  %496 = vmatpush1.msra.mxu0 0.0
  %497 = vmatprep.subr.mxu0 0.0
  %498 = vmatpush1.msra.mxu0 0.0
  %499 = vmatprep.subr.mxu0 0.0
  %500 = vmatpush1.msra.mxu0 0.0
  %501 = vmatprep.subr.mxu0 0.0
  %502 = vmatpush1.msra.mxu0 0.0
  %503 = vmatprep.subr.mxu0 0.0
  %504 = vmatpush1.msra.mxu0 0.0
  %505 = vmatprep.subr.mxu0 0.0
  %506 = vmatpush1.msra.mxu0 0.0
  %507 = vmatprep.subr.mxu0 0.0
  %508 = vmatpush1.msra.mxu0 0.0
  %509 = vmatprep.subr.mxu0 0.0
  %510 = vmatpush1.msra.mxu0 0.0
  %511 = vmatprep.subr.mxu0 0.0
  %512 = vmatpush1.msra.mxu0 0.0
  %513 = vmatprep.subr.mxu0 0.0
  %514 = vmatpush1.msra.mxu0 0.0
  %515 = vmatprep.subr.mxu0 0.0
  %516 = vmatpush1.msra.mxu0 0.0
  %517 = vmatprep.subr.mxu0 0.0
  %518 = vmatpush1.msra.mxu0 0.0
  %519 = vmatprep.subr.mxu0 0.0
  %520 = vmatpush1.msra.mxu0 0.0
  %521 = vmatprep.subr.mxu0 0.0
  %522 = vmatpush1.msra.mxu0 0.0
  %523 = vmatprep.subr.mxu0 0.0
  %524 = vmatpush1.msra.mxu0 0.0
  %525 = vmatprep.subr.mxu0 0.0
  %526 = vmatpush1.msra.mxu0 0.0
  %527 = vmatprep.subr.mxu0 0.0
  %528 = vmatpush1.msra.mxu0 0.0
  %529 = vmatprep.subr.mxu0 0.0
  %530 = vmatpush1.msra.mxu0 0.0
  %531 = vmatprep.subr.mxu0 0.0
  %532 = vmatpush1.msra.mxu0 0.0
  %533 = vmatprep.subr.mxu0 0.0
  %534 = vmatpush1.msra.mxu0 0.0
  %535 = vmatprep.subr.mxu0 0.0
  %536 = vmatpush1.msra.mxu0 0.0
  %537 = vmatprep.subr.mxu0 0.0
  %538 = vmatpush1.msra.mxu0 0.0
  %539 = vmatprep.mubr.f32.mxu0 0.0
  %v540 = vand.u32 %v54, 4294901760
  %541 = vmatmul.mubr.f32.gmra.mrb[0].mxu0 %v540
  %v542 = vpop.f32.mrb[0].mxu0
  %v543 = vadd.f32 %v467, %v542
  %v544 = vpop.f32.mrb[0].mxu0
  %v545 = vadd.f32 %v469, %v544
  %546 = vdwg.mxu0
  %v547 = vand.u32 %v25, 4294901760
  %548 = vmatprep.subr.mxu0 %v547
  %v549 = vand.u32 %v24, 4294901760
  %550 = vmatpush1.msra.mxu0 %v549
  %v551 = vand.u32 %v29, 4294901760
  %552 = vmatprep.subr.mxu0 %v551
  %v553 = vand.u32 %v28, 4294901760
  %554 = vmatpush1.msra.mxu0 %v553
  %555 = vmatprep.subr.mxu0 0.0
  %556 = vmatpush1.msra.mxu0 0.0
  %557 = vmatprep.subr.mxu0 0.0
  %558 = vmatpush1.msra.mxu0 0.0
  %559 = vmatprep.subr.mxu0 0.0
  %560 = vmatpush1.msra.mxu0 0.0
  %561 = vmatprep.subr.mxu0 0.0
  %562 = vmatpush1.msra.mxu0 0.0
  %563 = vmatprep.subr.mxu0 0.0
  %564 = vmatpush1.msra.mxu0 0.0
  %565 = vmatprep.subr.mxu0 0.0
  %566 = vmatpush1.msra.mxu0 0.0
  %567 = vmatprep.subr.mxu0 0.0
  %568 = vmatpush1.msra.mxu0 0.0
  %569 = vmatprep.subr.mxu0 0.0
  %570 = vmatpush1.msra.mxu0 0.0
  %571 = vmatprep.subr.mxu0 0.0
  %572 = vmatpush1.msra.mxu0 0.0
  %573 = vmatprep.subr.mxu0 0.0
  %574 = vmatpush1.msra.mxu0 0.0
  %575 = vmatprep.subr.mxu0 0.0
  %576 = vmatpush1.msra.mxu0 0.0
  %577 = vmatprep.subr.mxu0 0.0
  %578 = vmatpush1.msra.mxu0 0.0
  %579 = vmatprep.subr.mxu0 0.0
  %580 = vmatpush1.msra.mxu0 0.0
  %581 = vmatprep.subr.mxu0 0.0
  %582 = vmatpush1.msra.mxu0 0.0
  %583 = vmatprep.subr.mxu0 0.0
  %584 = vmatpush1.msra.mxu0 0.0
  %585 = vmatprep.subr.mxu0 0.0
  %586 = vmatpush1.msra.mxu0 0.0
  %587 = vmatprep.subr.mxu0 0.0
  %588 = vmatpush1.msra.mxu0 0.0
  %589 = vmatprep.subr.mxu0 0.0
  %590 = vmatpush1.msra.mxu0 0.0
  %591 = vmatprep.subr.mxu0 0.0
  %592 = vmatpush1.msra.mxu0 0.0
  %593 = vmatprep.subr.mxu0 0.0
  %594 = vmatpush1.msra.mxu0 0.0
  %595 = vmatprep.subr.mxu0 0.0
  %596 = vmatpush1.msra.mxu0 0.0
  %597 = vmatprep.subr.mxu0 0.0
  %598 = vmatpush1.msra.mxu0 0.0
  %599 = vmatprep.subr.mxu0 0.0
  %600 = vmatpush1.msra.mxu0 0.0
  %601 = vmatprep.subr.mxu0 0.0
  %602 = vmatpush1.msra.mxu0 0.0
  %603 = vmatprep.subr.mxu0 0.0
  %604 = vmatpush1.msra.mxu0 0.0
  %605 = vmatprep.subr.mxu0 0.0
  %606 = vmatpush1.msra.mxu0 0.0
  %607 = vmatprep.subr.mxu0 0.0
  %608 = vmatpush1.msra.mxu0 0.0
  %609 = vmatprep.subr.mxu0 0.0
  %610 = vmatpush1.msra.mxu0 0.0
  %611 = vmatprep.subr.mxu0 0.0
  %612 = vmatpush1.msra.mxu0 0.0
  %613 = vmatprep.subr.mxu0 0.0
  %614 = vmatpush1.msra.mxu0 0.0
  %615 = vmatprep.mubr.f32.mxu0 0.0
  %v616 = vand.u32 %v54, 4294901760
  %v617 = vsub.f32 %v54, %v616
  %v618 = vand.u32 %v617, 4294901760
  %v619 = vsub.f32 %v617, %v618
  %v620 = vand.u32 %v619, 4294901760
  %621 = vmatmul.mubr.f32.gmra.mrb[0].mxu0 %v620
  %v622 = vpop.f32.mrb[0].mxu0
  %v623 = vadd.f32 %v43, %v622
  %v624 = vpop.f32.mrb[0].mxu0
  %v625 = vadd.f32 %v47, %v624
  %626 = vdwg.mxu0
  %v627 = vand.u32 %v25, 4294901760
  %v628 = vsub.f32 %v25, %v627
  %v629 = vand.u32 %v628, 4294901760
  %v630 = vsub.f32 %v628, %v629
  %v631 = vand.u32 %v630, 4294901760
  %632 = vmatprep.subr.mxu0 %v631
  %v633 = vand.u32 %v24, 4294901760
  %v634 = vsub.f32 %v24, %v633
  %v635 = vand.u32 %v634, 4294901760
  %v636 = vsub.f32 %v634, %v635
  %v637 = vand.u32 %v636, 4294901760
  %638 = vmatpush1.msra.mxu0 %v637
  %v639 = vand.u32 %v29, 4294901760
  %v640 = vsub.f32 %v29, %v639
  %v641 = vand.u32 %v640, 4294901760
  %v642 = vsub.f32 %v640, %v641
  %v643 = vand.u32 %v642, 4294901760
  %644 = vmatprep.subr.mxu0 %v643
  %v645 = vand.u32 %v28, 4294901760
  %v646 = vsub.f32 %v28, %v645
  %v647 = vand.u32 %v646, 4294901760
  %v648 = vsub.f32 %v646, %v647
  %v649 = vand.u32 %v648, 4294901760
  %650 = vmatpush1.msra.mxu0 %v649
  %651 = vmatprep.subr.mxu0 0.0
  %652 = vmatpush1.msra.mxu0 0.0
  %653 = vmatprep.subr.mxu0 0.0
  %654 = vmatpush1.msra.mxu0 0.0
  %655 = vmatprep.subr.mxu0 0.0
  %656 = vmatpush1.msra.mxu0 0.0
  %657 = vmatprep.subr.mxu0 0.0
  %658 = vmatpush1.msra.mxu0 0.0
  %659 = vmatprep.subr.mxu0 0.0
  %660 = vmatpush1.msra.mxu0 0.0
  %661 = vmatprep.subr.mxu0 0.0
  %662 = vmatpush1.msra.mxu0 0.0
  %663 = vmatprep.subr.mxu0 0.0
  %664 = vmatpush1.msra.mxu0 0.0
  %665 = vmatprep.subr.mxu0 0.0
  %666 = vmatpush1.msra.mxu0 0.0
  %667 = vmatprep.subr.mxu0 0.0
  %668 = vmatpush1.msra.mxu0 0.0
  %669 = vmatprep.subr.mxu0 0.0
  %670 = vmatpush1.msra.mxu0 0.0
  %671 = vmatprep.subr.mxu0 0.0
  %672 = vmatpush1.msra.mxu0 0.0
  %673 = vmatprep.subr.mxu0 0.0
  %674 = vmatpush1.msra.mxu0 0.0
  %675 = vmatprep.subr.mxu0 0.0
  %676 = vmatpush1.msra.mxu0 0.0
  %677 = vmatprep.subr.mxu0 0.0
  %678 = vmatpush1.msra.mxu0 0.0
  %679 = vmatprep.subr.mxu0 0.0
  %680 = vmatpush1.msra.mxu0 0.0
  %681 = vmatprep.subr.mxu0 0.0
  %682 = vmatpush1.msra.mxu0 0.0
  %683 = vmatprep.subr.mxu0 0.0
  %684 = vmatpush1.msra.mxu0 0.0
  %685 = vmatprep.subr.mxu0 0.0
  %686 = vmatpush1.msra.mxu0 0.0
  %687 = vmatprep.subr.mxu0 0.0
  %688 = vmatpush1.msra.mxu0 0.0
  %689 = vmatprep.subr.mxu0 0.0
  %690 = vmatpush1.msra.mxu0 0.0
  %691 = vmatprep.subr.mxu0 0.0
  %692 = vmatpush1.msra.mxu0 0.0
  %693 = vmatprep.subr.mxu0 0.0
  %694 = vmatpush1.msra.mxu0 0.0
  %695 = vmatprep.subr.mxu0 0.0
  %696 = vmatpush1.msra.mxu0 0.0
  %697 = vmatprep.subr.mxu0 0.0
  %698 = vmatpush1.msra.mxu0 0.0
  %699 = vmatprep.subr.mxu0 0.0
  %700 = vmatpush1.msra.mxu0 0.0
  %701 = vmatprep.subr.mxu0 0.0
  %702 = vmatpush1.msra.mxu0 0.0
  %703 = vmatprep.subr.mxu0 0.0
  %704 = vmatpush1.msra.mxu0 0.0
  %705 = vmatprep.subr.mxu0 0.0
  %706 = vmatpush1.msra.mxu0 0.0
  %707 = vmatprep.subr.mxu0 0.0
  %708 = vmatpush1.msra.mxu0 0.0
  %709 = vmatprep.subr.mxu0 0.0
  %710 = vmatpush1.msra.mxu0 0.0
  %711 = vmatprep.mubr.f32.mxu0 0.0
  %v712 = vand.u32 %v54, 4294901760
  %713 = vmatmul.mubr.f32.gmra.mrb[0].mxu0 %v712
  %v714 = vpop.f32.mrb[0].mxu0
  %v715 = vadd.f32 %v623, %v714
  %v716 = vpop.f32.mrb[0].mxu0
  %v717 = vadd.f32 %v625, %v716
  %718 = vdwg.mxu0
  %v719 = vand.u32 %v25, 4294901760
  %v720 = vsub.f32 %v25, %v719
  %721 = vmatprep.subr.mxu0 %v720
  %v722 = vand.u32 %v24, 4294901760
  %v723 = vsub.f32 %v24, %v722
  %724 = vmatpush1.msra.mxu0 %v723
  %v725 = vand.u32 %v29, 4294901760
  %v726 = vsub.f32 %v29, %v725
  %727 = vmatprep.subr.mxu0 %v726
  %v728 = vand.u32 %v28, 4294901760
  %v729 = vsub.f32 %v28, %v728
  %730 = vmatpush1.msra.mxu0 %v729
  %731 = vmatprep.subr.mxu0 0.0
  %732 = vmatpush1.msra.mxu0 0.0
  %733 = vmatprep.subr.mxu0 0.0
  %734 = vmatpush1.msra.mxu0 0.0
  %735 = vmatprep.subr.mxu0 0.0
  %736 = vmatpush1.msra.mxu0 0.0
  %737 = vmatprep.subr.mxu0 0.0
  %738 = vmatpush1.msra.mxu0 0.0
  %739 = vmatprep.subr.mxu0 0.0
  %740 = vmatpush1.msra.mxu0 0.0
  %741 = vmatprep.subr.mxu0 0.0
  %742 = vmatpush1.msra.mxu0 0.0
  %743 = vmatprep.subr.mxu0 0.0
  %744 = vmatpush1.msra.mxu0 0.0
  %745 = vmatprep.subr.mxu0 0.0
  %746 = vmatpush1.msra.mxu0 0.0
  %747 = vmatprep.subr.mxu0 0.0
  %748 = vmatpush1.msra.mxu0 0.0
  %749 = vmatprep.subr.mxu0 0.0
  %750 = vmatpush1.msra.mxu0 0.0
  %751 = vmatprep.subr.mxu0 0.0
  %752 = vmatpush1.msra.mxu0 0.0
  %753 = vmatprep.subr.mxu0 0.0
  %754 = vmatpush1.msra.mxu0 0.0
  %755 = vmatprep.subr.mxu0 0.0
  %756 = vmatpush1.msra.mxu0 0.0
  %757 = vmatprep.subr.mxu0 0.0
  %758 = vmatpush1.msra.mxu0 0.0
  %759 = vmatprep.subr.mxu0 0.0
  %760 = vmatpush1.msra.mxu0 0.0
  %761 = vmatprep.subr.mxu0 0.0
  %762 = vmatpush1.msra.mxu0 0.0
  %763 = vmatprep.subr.mxu0 0.0
  %764 = vmatpush1.msra.mxu0 0.0
  %765 = vmatprep.subr.mxu0 0.0
  %766 = vmatpush1.msra.mxu0 0.0
  %767 = vmatprep.subr.mxu0 0.0
  %768 = vmatpush1.msra.mxu0 0.0
  %769 = vmatprep.subr.mxu0 0.0
  %770 = vmatpush1.msra.mxu0 0.0
  %771 = vmatprep.subr.mxu0 0.0
  %772 = vmatpush1.msra.mxu0 0.0
  %773 = vmatprep.subr.mxu0 0.0
  %774 = vmatpush1.msra.mxu0 0.0
  %775 = vmatprep.subr.mxu0 0.0
  %776 = vmatpush1.msra.mxu0 0.0
  %777 = vmatprep.subr.mxu0 0.0
  %778 = vmatpush1.msra.mxu0 0.0
  %779 = vmatprep.subr.mxu0 0.0
  %780 = vmatpush1.msra.mxu0 0.0
  %781 = vmatprep.subr.mxu0 0.0
  %782 = vmatpush1.msra.mxu0 0.0
  %783 = vmatprep.subr.mxu0 0.0
  %784 = vmatpush1.msra.mxu0 0.0
  %785 = vmatprep.subr.mxu0 0.0
  %786 = vmatpush1.msra.mxu0 0.0
  %787 = vmatprep.subr.mxu0 0.0
  %788 = vmatpush1.msra.mxu0 0.0
  %789 = vmatprep.subr.mxu0 0.0
  %790 = vmatpush1.msra.mxu0 0.0
  %791 = vmatprep.mubr.f32.mxu0 0.0
  %v792 = vand.u32 %v54, 4294901760
  %v793 = vsub.f32 %v54, %v792
  %794 = vmatmul.mubr.f32.gmra.mrb[0].mxu0 %v793
  %v795 = vpop.f32.mrb[0].mxu0
  %v796 = vadd.f32 %v715, %v795
  %v797 = vpop.f32.mrb[0].mxu0
  %v798 = vadd.f32 %v717, %v797
  %799 = vdwg.mxu0
  %v800 = vand.u32 %v25, 4294901760
  %801 = vmatprep.subr.mxu0 %v800
  %v802 = vand.u32 %v24, 4294901760
  %803 = vmatpush1.msra.mxu0 %v802
  %v804 = vand.u32 %v29, 4294901760
  %805 = vmatprep.subr.mxu0 %v804
  %v806 = vand.u32 %v28, 4294901760
  %807 = vmatpush1.msra.mxu0 %v806
  %808 = vmatprep.subr.mxu0 0.0
  %809 = vmatpush1.msra.mxu0 0.0
  %810 = vmatprep.subr.mxu0 0.0
  %811 = vmatpush1.msra.mxu0 0.0
  %812 = vmatprep.subr.mxu0 0.0
  %813 = vmatpush1.msra.mxu0 0.0
  %814 = vmatprep.subr.mxu0 0.0
  %815 = vmatpush1.msra.mxu0 0.0
  %816 = vmatprep.subr.mxu0 0.0
  %817 = vmatpush1.msra.mxu0 0.0
  %818 = vmatprep.subr.mxu0 0.0
  %819 = vmatpush1.msra.mxu0 0.0
  %820 = vmatprep.subr.mxu0 0.0
  %821 = vmatpush1.msra.mxu0 0.0
  %822 = vmatprep.subr.mxu0 0.0
  %823 = vmatpush1.msra.mxu0 0.0
  %824 = vmatprep.subr.mxu0 0.0
  %825 = vmatpush1.msra.mxu0 0.0
  %826 = vmatprep.subr.mxu0 0.0
  %827 = vmatpush1.msra.mxu0 0.0
  %828 = vmatprep.subr.mxu0 0.0
  %829 = vmatpush1.msra.mxu0 0.0
  %830 = vmatprep.subr.mxu0 0.0
  %831 = vmatpush1.msra.mxu0 0.0
  %832 = vmatprep.subr.mxu0 0.0
  %833 = vmatpush1.msra.mxu0 0.0
  %834 = vmatprep.subr.mxu0 0.0
  %835 = vmatpush1.msra.mxu0 0.0
  %836 = vmatprep.subr.mxu0 0.0
  %837 = vmatpush1.msra.mxu0 0.0
  %838 = vmatprep.subr.mxu0 0.0
  %839 = vmatpush1.msra.mxu0 0.0
  %840 = vmatprep.subr.mxu0 0.0
  %841 = vmatpush1.msra.mxu0 0.0
  %842 = vmatprep.subr.mxu0 0.0
  %843 = vmatpush1.msra.mxu0 0.0
  %844 = vmatprep.subr.mxu0 0.0
  %845 = vmatpush1.msra.mxu0 0.0
  %846 = vmatprep.subr.mxu0 0.0
  %847 = vmatpush1.msra.mxu0 0.0
  %848 = vmatprep.subr.mxu0 0.0
  %849 = vmatpush1.msra.mxu0 0.0
  %850 = vmatprep.subr.mxu0 0.0
  %851 = vmatpush1.msra.mxu0 0.0
  %852 = vmatprep.subr.mxu0 0.0
  %853 = vmatpush1.msra.mxu0 0.0
  %854 = vmatprep.subr.mxu0 0.0
  %855 = vmatpush1.msra.mxu0 0.0
  %856 = vmatprep.subr.mxu0 0.0
  %857 = vmatpush1.msra.mxu0 0.0
  %858 = vmatprep.subr.mxu0 0.0
  %859 = vmatpush1.msra.mxu0 0.0
  %860 = vmatprep.subr.mxu0 0.0
  %861 = vmatpush1.msra.mxu0 0.0
  %862 = vmatprep.subr.mxu0 0.0
  %863 = vmatpush1.msra.mxu0 0.0
  %864 = vmatprep.subr.mxu0 0.0
  %865 = vmatpush1.msra.mxu0 0.0
  %866 = vmatprep.subr.mxu0 0.0
  %867 = vmatpush1.msra.mxu0 0.0
  %868 = vmatprep.mubr.f32.mxu0 0.0
  %v869 = vand.u32 %v54, 4294901760
  %v870 = vsub.f32 %v54, %v869
  %v871 = vand.u32 %v870, 4294901760
  %872 = vmatmul.mubr.f32.gmra.mrb[0].mxu0 %v871
  %v873 = vpop.f32.mrb[0].mxu0
  %v874 = vadd.f32 %v796, %v873
  %v875 = vpop.f32.mrb[0].mxu0
  %v876 = vadd.f32 %v798, %v875
  %877 = vdwg.mxu0
  %v878 = vand.u32 %v25, 4294901760
  %v879 = vsub.f32 %v25, %v878
  %v880 = vand.u32 %v879, 4294901760
  %881 = vmatprep.subr.mxu0 %v880
  %v882 = vand.u32 %v24, 4294901760
  %v883 = vsub.f32 %v24, %v882
  %v884 = vand.u32 %v883, 4294901760
  %885 = vmatpush1.msra.mxu0 %v884
  %v886 = vand.u32 %v29, 4294901760
  %v887 = vsub.f32 %v29, %v886
  %v888 = vand.u32 %v887, 4294901760
  %889 = vmatprep.subr.mxu0 %v888
  %v890 = vand.u32 %v28, 4294901760
  %v891 = vsub.f32 %v28, %v890
  %v892 = vand.u32 %v891, 4294901760
  %893 = vmatpush1.msra.mxu0 %v892
  %894 = vmatprep.subr.mxu0 0.0
  %895 = vmatpush1.msra.mxu0 0.0
  %896 = vmatprep.subr.mxu0 0.0
  %897 = vmatpush1.msra.mxu0 0.0
  %898 = vmatprep.subr.mxu0 0.0
  %899 = vmatpush1.msra.mxu0 0.0
  %900 = vmatprep.subr.mxu0 0.0
  %901 = vmatpush1.msra.mxu0 0.0
  %902 = vmatprep.subr.mxu0 0.0
  %903 = vmatpush1.msra.mxu0 0.0
  %904 = vmatprep.subr.mxu0 0.0
  %905 = vmatpush1.msra.mxu0 0.0
  %906 = vmatprep.subr.mxu0 0.0
  %907 = vmatpush1.msra.mxu0 0.0
  %908 = vmatprep.subr.mxu0 0.0
  %909 = vmatpush1.msra.mxu0 0.0
  %910 = vmatprep.subr.mxu0 0.0
  %911 = vmatpush1.msra.mxu0 0.0
  %912 = vmatprep.subr.mxu0 0.0
  %913 = vmatpush1.msra.mxu0 0.0
  %914 = vmatprep.subr.mxu0 0.0
  %915 = vmatpush1.msra.mxu0 0.0
  %916 = vmatprep.subr.mxu0 0.0
  %917 = vmatpush1.msra.mxu0 0.0
  %918 = vmatprep.subr.mxu0 0.0
  %919 = vmatpush1.msra.mxu0 0.0
  %920 = vmatprep.subr.mxu0 0.0
  %921 = vmatpush1.msra.mxu0 0.0
  %922 = vmatprep.subr.mxu0 0.0
  %923 = vmatpush1.msra.mxu0 0.0
  %924 = vmatprep.subr.mxu0 0.0
  %925 = vmatpush1.msra.mxu0 0.0
  %926 = vmatprep.subr.mxu0 0.0
  %927 = vmatpush1.msra.mxu0 0.0
  %928 = vmatprep.subr.mxu0 0.0
  %929 = vmatpush1.msra.mxu0 0.0
  %930 = vmatprep.subr.mxu0 0.0
  %931 = vmatpush1.msra.mxu0 0.0
  %932 = vmatprep.subr.mxu0 0.0
  %933 = vmatpush1.msra.mxu0 0.0
  %934 = vmatprep.subr.mxu0 0.0
  %935 = vmatpush1.msra.mxu0 0.0
  %936 = vmatprep.subr.mxu0 0.0
  %937 = vmatpush1.msra.mxu0 0.0
  %938 = vmatprep.subr.mxu0 0.0
  %939 = vmatpush1.msra.mxu0 0.0
  %940 = vmatprep.subr.mxu0 0.0
  %941 = vmatpush1.msra.mxu0 0.0
  %942 = vmatprep.subr.mxu0 0.0
  %943 = vmatpush1.msra.mxu0 0.0
  %944 = vmatprep.subr.mxu0 0.0
  %945 = vmatpush1.msra.mxu0 0.0
  %946 = vmatprep.subr.mxu0 0.0
  %947 = vmatpush1.msra.mxu0 0.0
  %948 = vmatprep.subr.mxu0 0.0
  %949 = vmatpush1.msra.mxu0 0.0
  %950 = vmatprep.subr.mxu0 0.0
  %951 = vmatpush1.msra.mxu0 0.0
  %952 = vmatprep.subr.mxu0 0.0
  %953 = vmatpush1.msra.mxu0 0.0
  %954 = vmatprep.mubr.f32.mxu0 0.0
  %v955 = vand.u32 %v54, 4294901760
  %956 = vmatmul.mubr.f32.gmra.mrb[0].mxu0 %v955
  %v957 = vpop.f32.mrb[0].mxu0
  %v958 = vadd.f32 %v874, %v957
  %v959 = vpop.f32.mrb[0].mxu0
  %v960 = vadd.f32 %v876, %v959
  %961 = vdwg.mxu0
  %v962 = vand.u32 %v25, 4294901760
  %963 = vmatprep.subr.mxu0 %v962
  %v964 = vand.u32 %v24, 4294901760
  %965 = vmatpush1.msra.mxu0 %v964
  %v966 = vand.u32 %v29, 4294901760
  %967 = vmatprep.subr.mxu0 %v966
  %v968 = vand.u32 %v28, 4294901760
  %969 = vmatpush1.msra.mxu0 %v968
  %970 = vmatprep.subr.mxu0 0.0
  %971 = vmatpush1.msra.mxu0 0.0
  %972 = vmatprep.subr.mxu0 0.0
  %973 = vmatpush1.msra.mxu0 0.0
  %974 = vmatprep.subr.mxu0 0.0
  %975 = vmatpush1.msra.mxu0 0.0
  %976 = vmatprep.subr.mxu0 0.0
  %977 = vmatpush1.msra.mxu0 0.0
  %978 = vmatprep.subr.mxu0 0.0
  %979 = vmatpush1.msra.mxu0 0.0
  %980 = vmatprep.subr.mxu0 0.0
  %981 = vmatpush1.msra.mxu0 0.0
  %982 = vmatprep.subr.mxu0 0.0
  %983 = vmatpush1.msra.mxu0 0.0
  %984 = vmatprep.subr.mxu0 0.0
  %985 = vmatpush1.msra.mxu0 0.0
  %986 = vmatprep.subr.mxu0 0.0
  %987 = vmatpush1.msra.mxu0 0.0
  %988 = vmatprep.subr.mxu0 0.0
  %989 = vmatpush1.msra.mxu0 0.0
  %990 = vmatprep.subr.mxu0 0.0
  %991 = vmatpush1.msra.mxu0 0.0
  %992 = vmatprep.subr.mxu0 0.0
  %993 = vmatpush1.msra.mxu0 0.0
  %994 = vmatprep.subr.mxu0 0.0
  %995 = vmatpush1.msra.mxu0 0.0
  %996 = vmatprep.subr.mxu0 0.0
  %997 = vmatpush1.msra.mxu0 0.0
  %998 = vmatprep.subr.mxu0 0.0
  %999 = vmatpush1.msra.mxu0 0.0
  %1000 = vmatprep.subr.mxu0 0.0
  %1001 = vmatpush1.msra.mxu0 0.0
  %1002 = vmatprep.subr.mxu0 0.0
  %1003 = vmatpush1.msra.mxu0 0.0
  %1004 = vmatprep.subr.mxu0 0.0
  %1005 = vmatpush1.msra.mxu0 0.0
  %1006 = vmatprep.subr.mxu0 0.0
  %1007 = vmatpush1.msra.mxu0 0.0
  %1008 = vmatprep.subr.mxu0 0.0
  %1009 = vmatpush1.msra.mxu0 0.0
  %1010 = vmatprep.subr.mxu0 0.0
  %1011 = vmatpush1.msra.mxu0 0.0
  %1012 = vmatprep.subr.mxu0 0.0
  %1013 = vmatpush1.msra.mxu0 0.0
  %1014 = vmatprep.subr.mxu0 0.0
  %1015 = vmatpush1.msra.mxu0 0.0
  %1016 = vmatprep.subr.mxu0 0.0
  %1017 = vmatpush1.msra.mxu0 0.0
  %1018 = vmatprep.subr.mxu0 0.0
  %1019 = vmatpush1.msra.mxu0 0.0
  %1020 = vmatprep.subr.mxu0 0.0
  %1021 = vmatpush1.msra.mxu0 0.0
  %1022 = vmatprep.subr.mxu0 0.0
  %1023 = vmatpush1.msra.mxu0 0.0
  %1024 = vmatprep.subr.mxu0 0.0
  %1025 = vmatpush1.msra.mxu0 0.0
  %1026 = vmatprep.subr.mxu0 0.0
  %1027 = vmatpush1.msra.mxu0 0.0
  %1028 = vmatprep.subr.mxu0 0.0
  %1029 = vmatpush1.msra.mxu0 0.0
  %1030 = vmatprep.mubr.f32.mxu0 0.0
  %v1031 = vand.u32 %v54, 4294901760
  %1032 = vmatmul.mubr.f32.gmra.mrb[0].mxu0 %v1031
  %v1033 = vpop.f32.mrb[0].mxu0
  %v1034 = vadd.f32 %v958, %v1033
  %v1035 = vpop.f32.mrb[0].mxu0
  %v1036 = vadd.f32 %v960, %v1035
  %1037 = vdwg.mxu0
  %v1038 = vmax.f32 %v543, 0.0
  %v1039 = vmax.f32 %v545, 0.0
  %v1040 = vmax.f32 %v1034, 0.0
  %v1041 = vmax.f32 %v1036, 0.0
  %v1042 = vld [vmem:[%s3] sm:$0xff]
  %v1043 = vld [vmem:[%s3 + $0x8] sm:$0xff]
  %v1044 = vld [vmem:[%s3 + $0x10] sm:$0xff]
  %v1045 = vld [vmem:[%s3 + $0x18] sm:$0xff]
  %v1046 = vld [vmem:[%s3 + $0x20] sm:$0xff]
  %v1047 = vld [vmem:[%s3 + $0x28] sm:$0xff]
  %v1048 = vld [vmem:[%s3 + $0x30] sm:$0xff]
  %v1049 = vld [vmem:[%s3 + $0x38] sm:$0xff]
  %v1050 = vld [vmem:[%s3 + $0x40] sm:$0xff]
  %v1051 = vld [vmem:[%s3 + $0x48] sm:$0xff]
  %v1052 = vld [vmem:[%s3 + $0x50] sm:$0xff]
  %v1053 = vld [vmem:[%s3 + $0x58] sm:$0xff]
  %v1054 = vld [vmem:[%s3 + $0x60] sm:$0xff]
  %v1055 = vld [vmem:[%s3 + $0x68] sm:$0xff]
  %v1056 = vld [vmem:[%s3 + $0x70] sm:$0xff]
  %v1057 = vld [vmem:[%s3 + $0x78] sm:$0xff]
  %v1058 = vld [vmem:[%s3 + $0x80] sm:$0xff]
  %v1059 = vld [vmem:[%s3 + $0x88] sm:$0xff]
  %v1060 = vld [vmem:[%s3 + $0x90] sm:$0xff]
  %v1061 = vld [vmem:[%s3 + $0x98] sm:$0xff]
  %v1062 = vld [vmem:[%s3 + $0xa0] sm:$0xff]
  %v1063 = vld [vmem:[%s3 + $0xa8] sm:$0xff]
  %v1064 = vld [vmem:[%s3 + $0xb0] sm:$0xff]
  %v1065 = vld [vmem:[%s3 + $0xb8] sm:$0xff]
  %v1066 = vld [vmem:[%s3 + $0xc0] sm:$0xff]
  %v1067 = vld [vmem:[%s3 + $0xc8] sm:$0xff]
  %v1068 = vld [vmem:[%s3 + $0xd0] sm:$0xff]
  %v1069 = vld [vmem:[%s3 + $0xd8] sm:$0xff]
  %v1070 = vld [vmem:[%s3 + $0xe0] sm:$0xff]
  %v1071 = vld [vmem:[%s3 + $0xe8] sm:$0xff]
  %v1072 = vld [vmem:[%s3 + $0xf0] sm:$0xff]
  %v1073 = vld [vmem:[%s3 + $0xf8] sm:$0xff]
  %v1074 = vld [vmem:[%s3 + $0x100] sm:$0xff]
  %v1075 = vld [vmem:[%s3 + $0x108] sm:$0xff]
  %v1076 = vld [vmem:[%s3 + $0x110] sm:$0xff]
  %v1077 = vld [vmem:[%s3 + $0x118] sm:$0xff]
  %v1078 = vld [vmem:[%s3 + $0x120] sm:$0xff]
  %v1079 = vld [vmem:[%s3 + $0x128] sm:$0xff]
  %v1080 = vld [vmem:[%s3 + $0x130] sm:$0xff]
  %v1081 = vld [vmem:[%s3 + $0x138] sm:$0xff]
  %v1082 = vld [vmem:[%s3 + $0x140] sm:$0xff]
  %v1083 = vld [vmem:[%s3 + $0x148] sm:$0xff]
  %v1084 = vld [vmem:[%s3 + $0x150] sm:$0xff]
  %v1085 = vld [vmem:[%s3 + $0x158] sm:$0xff]
  %v1086 = vld [vmem:[%s3 + $0x160] sm:$0xff]
  %v1087 = vld [vmem:[%s3 + $0x168] sm:$0xff]
  %v1088 = vld [vmem:[%s3 + $0x170] sm:$0xff]
  %v1089 = vld [vmem:[%s3 + $0x178] sm:$0xff]
  %v1090 = vld [vmem:[%s3 + $0x180] sm:$0xff]
  %v1091 = vld [vmem:[%s3 + $0x188] sm:$0xff]
  %v1092 = vld [vmem:[%s3 + $0x190] sm:$0xff]
  %v1093 = vld [vmem:[%s3 + $0x198] sm:$0xff]
  %v1094 = vld [vmem:[%s3 + $0x1a0] sm:$0xff]
  %v1095 = vld [vmem:[%s3 + $0x1a8] sm:$0xff]
  %v1096 = vld [vmem:[%s3 + $0x1b0] sm:$0xff]
  %v1097 = vld [vmem:[%s3 + $0x1b8] sm:$0xff]
  %v1098 = vld [vmem:[%s3 + $0x1c0] sm:$0xff]
  %v1099 = vld [vmem:[%s3 + $0x1c8] sm:$0xff]
  %v1100 = vld [vmem:[%s3 + $0x1d0] sm:$0xff]
  %v1101 = vld [vmem:[%s3 + $0x1d8] sm:$0xff]
  %v1102 = vld [vmem:[%s3 + $0x1e0] sm:$0xff]
  %v1103 = vld [vmem:[%s3 + $0x1e8] sm:$0xff]
  %v1104 = vld [vmem:[%s3 + $0x1f0] sm:$0xff]
  %v1105 = vld [vmem:[%s3 + $0x1f8] sm:$0xff]
  %s1106 = sld [smem:[#allocation2]]
  %v1107 = vstv %s1106
  %1108 = vmatprep.subr.mxu0 0.0
  %v1109 = vand.u32 %v1042, 4294901760
  %1110 = vmatpush1.msra.mxu0 %v1109
  %1111 = vmatprep.subr.mxu0 0.0
  %v1112 = vand.u32 %v1043, 4294901760
  %1113 = vmatpush1.msra.mxu0 %v1112
  %1114 = vmatprep.subr.mxu0 0.0
  %v1115 = vand.u32 %v1044, 4294901760
  %1116 = vmatpush1.msra.mxu0 %v1115
  %1117 = vmatprep.subr.mxu0 0.0
  %v1118 = vand.u32 %v1045, 4294901760
  %1119 = vmatpush1.msra.mxu0 %v1118
  %1120 = vmatprep.subr.mxu0 0.0
  %v1121 = vand.u32 %v1046, 4294901760
  %1122 = vmatpush1.msra.mxu0 %v1121
  %1123 = vmatprep.subr.mxu0 0.0
  %v1124 = vand.u32 %v1047, 4294901760
  %1125 = vmatpush1.msra.mxu0 %v1124
  %1126 = vmatprep.subr.mxu0 0.0
  %v1127 = vand.u32 %v1048, 4294901760
  %1128 = vmatpush1.msra.mxu0 %v1127
  %1129 = vmatprep.subr.mxu0 0.0
  %v1130 = vand.u32 %v1049, 4294901760
  %1131 = vmatpush1.msra.mxu0 %v1130
  %1132 = vmatprep.subr.mxu0 0.0
  %v1133 = vand.u32 %v1050, 4294901760
  %1134 = vmatpush1.msra.mxu0 %v1133
  %1135 = vmatprep.subr.mxu0 0.0
  %v1136 = vand.u32 %v1051, 4294901760
  %1137 = vmatpush1.msra.mxu0 %v1136
  %1138 = vmatprep.subr.mxu0 0.0
  %v1139 = vand.u32 %v1052, 4294901760
  %1140 = vmatpush1.msra.mxu0 %v1139
  %1141 = vmatprep.subr.mxu0 0.0
  %v1142 = vand.u32 %v1053, 4294901760
  %1143 = vmatpush1.msra.mxu0 %v1142
  %1144 = vmatprep.subr.mxu0 0.0
  %v1145 = vand.u32 %v1054, 4294901760
  %1146 = vmatpush1.msra.mxu0 %v1145
  %1147 = vmatprep.subr.mxu0 0.0
  %v1148 = vand.u32 %v1055, 4294901760
  %1149 = vmatpush1.msra.mxu0 %v1148
  %1150 = vmatprep.subr.mxu0 0.0
  %v1151 = vand.u32 %v1056, 4294901760
  %1152 = vmatpush1.msra.mxu0 %v1151
  %1153 = vmatprep.subr.mxu0 0.0
  %v1154 = vand.u32 %v1057, 4294901760
  %1155 = vmatpush1.msra.mxu0 %v1154
  %1156 = vmatprep.subr.mxu0 0.0
  %v1157 = vand.u32 %v1058, 4294901760
  %1158 = vmatpush1.msra.mxu0 %v1157
  %1159 = vmatprep.subr.mxu0 0.0
  %v1160 = vand.u32 %v1059, 4294901760
  %1161 = vmatpush1.msra.mxu0 %v1160
  %1162 = vmatprep.subr.mxu0 0.0
  %v1163 = vand.u32 %v1060, 4294901760
  %1164 = vmatpush1.msra.mxu0 %v1163
  %1165 = vmatprep.subr.mxu0 0.0
  %v1166 = vand.u32 %v1061, 4294901760
  %1167 = vmatpush1.msra.mxu0 %v1166
  %1168 = vmatprep.subr.mxu0 0.0
  %v1169 = vand.u32 %v1062, 4294901760
  %1170 = vmatpush1.msra.mxu0 %v1169
  %1171 = vmatprep.subr.mxu0 0.0
  %v1172 = vand.u32 %v1063, 4294901760
  %1173 = vmatpush1.msra.mxu0 %v1172
  %1174 = vmatprep.subr.mxu0 0.0
  %v1175 = vand.u32 %v1064, 4294901760
  %1176 = vmatpush1.msra.mxu0 %v1175
  %1177 = vmatprep.subr.mxu0 0.0
  %v1178 = vand.u32 %v1065, 4294901760
  %1179 = vmatpush1.msra.mxu0 %v1178
  %1180 = vmatprep.subr.mxu0 0.0
  %v1181 = vand.u32 %v1066, 4294901760
  %1182 = vmatpush1.msra.mxu0 %v1181
  %1183 = vmatprep.subr.mxu0 0.0
  %v1184 = vand.u32 %v1067, 4294901760
  %1185 = vmatpush1.msra.mxu0 %v1184
  %1186 = vmatprep.subr.mxu0 0.0
  %v1187 = vand.u32 %v1068, 4294901760
  %1188 = vmatpush1.msra.mxu0 %v1187
  %1189 = vmatprep.subr.mxu0 0.0
  %v1190 = vand.u32 %v1069, 4294901760
  %1191 = vmatpush1.msra.mxu0 %v1190
  %1192 = vmatprep.subr.mxu0 0.0
  %v1193 = vand.u32 %v1070, 4294901760
  %1194 = vmatpush1.msra.mxu0 %v1193
  %1195 = vmatprep.subr.mxu0 0.0
  %v1196 = vand.u32 %v1071, 4294901760
  %1197 = vmatpush1.msra.mxu0 %v1196
  %1198 = vmatprep.subr.mxu0 0.0
  %v1199 = vand.u32 %v1072, 4294901760
  %1200 = vmatpush1.msra.mxu0 %v1199
  %1201 = vmatprep.subr.mxu0 0.0
  %v1202 = vand.u32 %v1073, 4294901760
  %1203 = vmatpush1.msra.mxu0 %v1202
  %v1204 = vand.u32 %v1039, 4294901760
  %v1205 = vsub.f32 %v1039, %v1204
  %v1206 = vand.u32 %v1205, 4294901760
  %v1207 = vsub.f32 %v1205, %v1206
  %v1208 = vand.u32 %v1207, 4294901760
  %1209 = vmatprep.mubr.f32.mxu0 %v1208
  %v1210 = vand.u32 %v1038, 4294901760
  %v1211 = vsub.f32 %v1038, %v1210
  %v1212 = vand.u32 %v1211, 4294901760
  %v1213 = vsub.f32 %v1211, %v1212
  %v1214 = vand.u32 %v1213, 4294901760
  %1215 = vmatmul.mubr.f32.gmra.mrb[0].mxu0 %v1214
  %v1216 = vpop.f32.mrb[0].mxu0
  %v1217 = vadd.f32 %v1107, %v1216
  %v1218 = vpop.f32.mrb[0].mxu0
  %1219 = vdwg.mxu0
  %1220 = vmatprep.subr.mxu0 0.0
  %v1221 = vand.u32 %v1042, 4294901760
  %v1222 = vsub.f32 %v1042, %v1221
  %v1223 = vand.u32 %v1222, 4294901760
  %v1224 = vsub.f32 %v1222, %v1223
  %v1225 = vand.u32 %v1224, 4294901760
  %1226 = vmatpush1.msra.mxu0 %v1225
  %1227 = vmatprep.subr.mxu0 0.0
  %v1228 = vand.u32 %v1043, 4294901760
  %v1229 = vsub.f32 %v1043, %v1228
  %v1230 = vand.u32 %v1229, 4294901760
  %v1231 = vsub.f32 %v1229, %v1230
  %v1232 = vand.u32 %v1231, 4294901760
  %1233 = vmatpush1.msra.mxu0 %v1232
  %1234 = vmatprep.subr.mxu0 0.0
  %v1235 = vand.u32 %v1044, 4294901760
  %v1236 = vsub.f32 %v1044, %v1235
  %v1237 = vand.u32 %v1236, 4294901760
  %v1238 = vsub.f32 %v1236, %v1237
  %v1239 = vand.u32 %v1238, 4294901760
  %1240 = vmatpush1.msra.mxu0 %v1239
  %1241 = vmatprep.subr.mxu0 0.0
  %v1242 = vand.u32 %v1045, 4294901760
  %v1243 = vsub.f32 %v1045, %v1242
  %v1244 = vand.u32 %v1243, 4294901760
  %v1245 = vsub.f32 %v1243, %v1244
  %v1246 = vand.u32 %v1245, 4294901760
  %1247 = vmatpush1.msra.mxu0 %v1246
  %1248 = vmatprep.subr.mxu0 0.0
  %v1249 = vand.u32 %v1046, 4294901760
  %v1250 = vsub.f32 %v1046, %v1249
  %v1251 = vand.u32 %v1250, 4294901760
  %v1252 = vsub.f32 %v1250, %v1251
  %v1253 = vand.u32 %v1252, 4294901760
  %1254 = vmatpush1.msra.mxu0 %v1253
  %1255 = vmatprep.subr.mxu0 0.0
  %v1256 = vand.u32 %v1047, 4294901760
  %v1257 = vsub.f32 %v1047, %v1256
  %v1258 = vand.u32 %v1257, 4294901760
  %v1259 = vsub.f32 %v1257, %v1258
  %v1260 = vand.u32 %v1259, 4294901760
  %1261 = vmatpush1.msra.mxu0 %v1260
  %1262 = vmatprep.subr.mxu0 0.0
  %v1263 = vand.u32 %v1048, 4294901760
  %v1264 = vsub.f32 %v1048, %v1263
  %v1265 = vand.u32 %v1264, 4294901760
  %v1266 = vsub.f32 %v1264, %v1265
  %v1267 = vand.u32 %v1266, 4294901760
  %1268 = vmatpush1.msra.mxu0 %v1267
  %1269 = vmatprep.subr.mxu0 0.0
  %v1270 = vand.u32 %v1049, 4294901760
  %v1271 = vsub.f32 %v1049, %v1270
  %v1272 = vand.u32 %v1271, 4294901760
  %v1273 = vsub.f32 %v1271, %v1272
  %v1274 = vand.u32 %v1273, 4294901760
  %1275 = vmatpush1.msra.mxu0 %v1274
  %1276 = vmatprep.subr.mxu0 0.0
  %v1277 = vand.u32 %v1050, 4294901760
  %v1278 = vsub.f32 %v1050, %v1277
  %v1279 = vand.u32 %v1278, 4294901760
  %v1280 = vsub.f32 %v1278, %v1279
  %v1281 = vand.u32 %v1280, 4294901760
  %1282 = vmatpush1.msra.mxu0 %v1281
  %1283 = vmatprep.subr.mxu0 0.0
  %v1284 = vand.u32 %v1051, 4294901760
  %v1285 = vsub.f32 %v1051, %v1284
  %v1286 = vand.u32 %v1285, 4294901760
  %v1287 = vsub.f32 %v1285, %v1286
  %v1288 = vand.u32 %v1287, 4294901760
  %1289 = vmatpush1.msra.mxu0 %v1288
  %1290 = vmatprep.subr.mxu0 0.0
  %v1291 = vand.u32 %v1052, 4294901760
  %v1292 = vsub.f32 %v1052, %v1291
  %v1293 = vand.u32 %v1292, 4294901760
  %v1294 = vsub.f32 %v1292, %v1293
  %v1295 = vand.u32 %v1294, 4294901760
  %1296 = vmatpush1.msra.mxu0 %v1295
  %1297 = vmatprep.subr.mxu0 0.0
  %v1298 = vand.u32 %v1053, 4294901760
  %v1299 = vsub.f32 %v1053, %v1298
  %v1300 = vand.u32 %v1299, 4294901760
  %v1301 = vsub.f32 %v1299, %v1300
  %v1302 = vand.u32 %v1301, 4294901760
  %1303 = vmatpush1.msra.mxu0 %v1302
  %1304 = vmatprep.subr.mxu0 0.0
  %v1305 = vand.u32 %v1054, 4294901760
  %v1306 = vsub.f32 %v1054, %v1305
  %v1307 = vand.u32 %v1306, 4294901760
  %v1308 = vsub.f32 %v1306, %v1307
  %v1309 = vand.u32 %v1308, 4294901760
  %1310 = vmatpush1.msra.mxu0 %v1309
  %1311 = vmatprep.subr.mxu0 0.0
  %v1312 = vand.u32 %v1055, 4294901760
  %v1313 = vsub.f32 %v1055, %v1312
  %v1314 = vand.u32 %v1313, 4294901760
  %v1315 = vsub.f32 %v1313, %v1314
  %v1316 = vand.u32 %v1315, 4294901760
  %1317 = vmatpush1.msra.mxu0 %v1316
  %1318 = vmatprep.subr.mxu0 0.0
  %v1319 = vand.u32 %v1056, 4294901760
  %v1320 = vsub.f32 %v1056, %v1319
  %v1321 = vand.u32 %v1320, 4294901760
  %v1322 = vsub.f32 %v1320, %v1321
  %v1323 = vand.u32 %v1322, 4294901760
  %1324 = vmatpush1.msra.mxu0 %v1323
  %1325 = vmatprep.subr.mxu0 0.0
  %v1326 = vand.u32 %v1057, 4294901760
  %v1327 = vsub.f32 %v1057, %v1326
  %v1328 = vand.u32 %v1327, 4294901760
  %v1329 = vsub.f32 %v1327, %v1328
  %v1330 = vand.u32 %v1329, 4294901760
  %1331 = vmatpush1.msra.mxu0 %v1330
  %1332 = vmatprep.subr.mxu0 0.0
  %v1333 = vand.u32 %v1058, 4294901760
  %v1334 = vsub.f32 %v1058, %v1333
  %v1335 = vand.u32 %v1334, 4294901760
  %v1336 = vsub.f32 %v1334, %v1335
  %v1337 = vand.u32 %v1336, 4294901760
  %1338 = vmatpush1.msra.mxu0 %v1337
  %1339 = vmatprep.subr.mxu0 0.0
  %v1340 = vand.u32 %v1059, 4294901760
  %v1341 = vsub.f32 %v1059, %v1340
  %v1342 = vand.u32 %v1341, 4294901760
  %v1343 = vsub.f32 %v1341, %v1342
  %v1344 = vand.u32 %v1343, 4294901760
  %1345 = vmatpush1.msra.mxu0 %v1344
  %1346 = vmatprep.subr.mxu0 0.0
  %v1347 = vand.u32 %v1060, 4294901760
  %v1348 = vsub.f32 %v1060, %v1347
  %v1349 = vand.u32 %v1348, 4294901760
  %v1350 = vsub.f32 %v1348, %v1349
  %v1351 = vand.u32 %v1350, 4294901760
  %1352 = vmatpush1.msra.mxu0 %v1351
  %1353 = vmatprep.subr.mxu0 0.0
  %v1354 = vand.u32 %v1061, 4294901760
  %v1355 = vsub.f32 %v1061, %v1354
  %v1356 = vand.u32 %v1355, 4294901760
  %v1357 = vsub.f32 %v1355, %v1356
  %v1358 = vand.u32 %v1357, 4294901760
  %1359 = vmatpush1.msra.mxu0 %v1358
  %1360 = vmatprep.subr.mxu0 0.0
  %v1361 = vand.u32 %v1062, 4294901760
  %v1362 = vsub.f32 %v1062, %v1361
  %v1363 = vand.u32 %v1362, 4294901760
  %v1364 = vsub.f32 %v1362, %v1363
  %v1365 = vand.u32 %v1364, 4294901760
  %1366 = vmatpush1.msra.mxu0 %v1365
  %1367 = vmatprep.subr.mxu0 0.0
  %v1368 = vand.u32 %v1063, 4294901760
  %v1369 = vsub.f32 %v1063, %v1368
  %v1370 = vand.u32 %v1369, 4294901760
  %v1371 = vsub.f32 %v1369, %v1370
  %v1372 = vand.u32 %v1371, 4294901760
  %1373 = vmatpush1.msra.mxu0 %v1372
  %1374 = vmatprep.subr.mxu0 0.0
  %v1375 = vand.u32 %v1064, 4294901760
  %v1376 = vsub.f32 %v1064, %v1375
  %v1377 = vand.u32 %v1376, 4294901760
  %v1378 = vsub.f32 %v1376, %v1377
  %v1379 = vand.u32 %v1378, 4294901760
  %1380 = vmatpush1.msra.mxu0 %v1379
  %1381 = vmatprep.subr.mxu0 0.0
  %v1382 = vand.u32 %v1065, 4294901760
  %v1383 = vsub.f32 %v1065, %v1382
  %v1384 = vand.u32 %v1383, 4294901760
  %v1385 = vsub.f32 %v1383, %v1384
  %v1386 = vand.u32 %v1385, 4294901760
  %1387 = vmatpush1.msra.mxu0 %v1386
  %1388 = vmatprep.subr.mxu0 0.0
  %v1389 = vand.u32 %v1066, 4294901760
  %v1390 = vsub.f32 %v1066, %v1389
  %v1391 = vand.u32 %v1390, 4294901760
  %v1392 = vsub.f32 %v1390, %v1391
  %v1393 = vand.u32 %v1392, 4294901760
  %1394 = vmatpush1.msra.mxu0 %v1393
  %1395 = vmatprep.subr.mxu0 0.0
  %v1396 = vand.u32 %v1067, 4294901760
  %v1397 = vsub.f32 %v1067, %v1396
  %v1398 = vand.u32 %v1397, 4294901760
  %v1399 = vsub.f32 %v1397, %v1398
  %v1400 = vand.u32 %v1399, 4294901760
  %1401 = vmatpush1.msra.mxu0 %v1400
  %1402 = vmatprep.subr.mxu0 0.0
  %v1403 = vand.u32 %v1068, 4294901760
  %v1404 = vsub.f32 %v1068, %v1403
  %v1405 = vand.u32 %v1404, 4294901760
  %v1406 = vsub.f32 %v1404, %v1405
  %v1407 = vand.u32 %v1406, 4294901760
  %1408 = vmatpush1.msra.mxu0 %v1407
  %1409 = vmatprep.subr.mxu0 0.0
  %v1410 = vand.u32 %v1069, 4294901760
  %v1411 = vsub.f32 %v1069, %v1410
  %v1412 = vand.u32 %v1411, 4294901760
  %v1413 = vsub.f32 %v1411, %v1412
  %v1414 = vand.u32 %v1413, 4294901760
  %1415 = vmatpush1.msra.mxu0 %v1414
  %1416 = vmatprep.subr.mxu0 0.0
  %v1417 = vand.u32 %v1070, 4294901760
  %v1418 = vsub.f32 %v1070, %v1417
  %v1419 = vand.u32 %v1418, 4294901760
  %v1420 = vsub.f32 %v1418, %v1419
  %v1421 = vand.u32 %v1420, 4294901760
  %1422 = vmatpush1.msra.mxu0 %v1421
  %1423 = vmatprep.subr.mxu0 0.0
  %v1424 = vand.u32 %v1071, 4294901760
  %v1425 = vsub.f32 %v1071, %v1424
  %v1426 = vand.u32 %v1425, 4294901760
  %v1427 = vsub.f32 %v1425, %v1426
  %v1428 = vand.u32 %v1427, 4294901760
  %1429 = vmatpush1.msra.mxu0 %v1428
  %1430 = vmatprep.subr.mxu0 0.0
  %v1431 = vand.u32 %v1072, 4294901760
  %v1432 = vsub.f32 %v1072, %v1431
  %v1433 = vand.u32 %v1432, 4294901760
  %v1434 = vsub.f32 %v1432, %v1433
  %v1435 = vand.u32 %v1434, 4294901760
  %1436 = vmatpush1.msra.mxu0 %v1435
  %1437 = vmatprep.subr.mxu0 0.0
  %v1438 = vand.u32 %v1073, 4294901760
  %v1439 = vsub.f32 %v1073, %v1438
  %v1440 = vand.u32 %v1439, 4294901760
  %v1441 = vsub.f32 %v1439, %v1440
  %v1442 = vand.u32 %v1441, 4294901760
  %1443 = vmatpush1.msra.mxu0 %v1442
  %v1444 = vand.u32 %v1039, 4294901760
  %1445 = vmatprep.mubr.f32.mxu0 %v1444
  %v1446 = vand.u32 %v1038, 4294901760
  %1447 = vmatmul.mubr.f32.gmra.mrb[0].mxu0 %v1446
  %v1448 = vpop.f32.mrb[0].mxu0
  %v1449 = vadd.f32 %v1217, %v1448
  %v1450 = vpop.f32.mrb[0].mxu0
  %1451 = vdwg.mxu0
  %1452 = vmatprep.subr.mxu0 0.0
  %v1453 = vand.u32 %v1042, 4294901760
  %v1454 = vsub.f32 %v1042, %v1453
  %1455 = vmatpush1.msra.mxu0 %v1454
  %1456 = vmatprep.subr.mxu0 0.0
  %v1457 = vand.u32 %v1043, 4294901760
  %v1458 = vsub.f32 %v1043, %v1457
  %1459 = vmatpush1.msra.mxu0 %v1458
  %1460 = vmatprep.subr.mxu0 0.0
  %v1461 = vand.u32 %v1044, 4294901760
  %v1462 = vsub.f32 %v1044, %v1461
  %1463 = vmatpush1.msra.mxu0 %v1462
  %1464 = vmatprep.subr.mxu0 0.0
  %v1465 = vand.u32 %v1045, 4294901760
  %v1466 = vsub.f32 %v1045, %v1465
  %1467 = vmatpush1.msra.mxu0 %v1466
  %1468 = vmatprep.subr.mxu0 0.0
  %v1469 = vand.u32 %v1046, 4294901760
  %v1470 = vsub.f32 %v1046, %v1469
  %1471 = vmatpush1.msra.mxu0 %v1470
  %1472 = vmatprep.subr.mxu0 0.0
  %v1473 = vand.u32 %v1047, 4294901760
  %v1474 = vsub.f32 %v1047, %v1473
  %1475 = vmatpush1.msra.mxu0 %v1474
  %1476 = vmatprep.subr.mxu0 0.0
  %v1477 = vand.u32 %v1048, 4294901760
  %v1478 = vsub.f32 %v1048, %v1477
  %1479 = vmatpush1.msra.mxu0 %v1478
  %1480 = vmatprep.subr.mxu0 0.0
  %v1481 = vand.u32 %v1049, 4294901760
  %v1482 = vsub.f32 %v1049, %v1481
  %1483 = vmatpush1.msra.mxu0 %v1482
  %1484 = vmatprep.subr.mxu0 0.0
  %v1485 = vand.u32 %v1050, 4294901760
  %v1486 = vsub.f32 %v1050, %v1485
  %1487 = vmatpush1.msra.mxu0 %v1486
  %1488 = vmatprep.subr.mxu0 0.0
  %v1489 = vand.u32 %v1051, 4294901760
  %v1490 = vsub.f32 %v1051, %v1489
  %1491 = vmatpush1.msra.mxu0 %v1490
  %1492 = vmatprep.subr.mxu0 0.0
  %v1493 = vand.u32 %v1052, 4294901760
  %v1494 = vsub.f32 %v1052, %v1493
  %1495 = vmatpush1.msra.mxu0 %v1494
  %1496 = vmatprep.subr.mxu0 0.0
  %v1497 = vand.u32 %v1053, 4294901760
  %v1498 = vsub.f32 %v1053, %v1497
  %1499 = vmatpush1.msra.mxu0 %v1498
  %1500 = vmatprep.subr.mxu0 0.0
  %v1501 = vand.u32 %v1054, 4294901760
  %v1502 = vsub.f32 %v1054, %v1501
  %1503 = vmatpush1.msra.mxu0 %v1502
  %1504 = vmatprep.subr.mxu0 0.0
  %v1505 = vand.u32 %v1055, 4294901760
  %v1506 = vsub.f32 %v1055, %v1505
  %1507 = vmatpush1.msra.mxu0 %v1506
  %1508 = vmatprep.subr.mxu0 0.0
  %v1509 = vand.u32 %v1056, 4294901760
  %v1510 = vsub.f32 %v1056, %v1509
  %1511 = vmatpush1.msra.mxu0 %v1510
  %1512 = vmatprep.subr.mxu0 0.0
  %v1513 = vand.u32 %v1057, 4294901760
  %v1514 = vsub.f32 %v1057, %v1513
  %1515 = vmatpush1.msra.mxu0 %v1514
  %1516 = vmatprep.subr.mxu0 0.0
  %v1517 = vand.u32 %v1058, 4294901760
  %v1518 = vsub.f32 %v1058, %v1517
  %1519 = vmatpush1.msra.mxu0 %v1518
  %1520 = vmatprep.subr.mxu0 0.0
  %v1521 = vand.u32 %v1059, 4294901760
  %v1522 = vsub.f32 %v1059, %v1521
  %1523 = vmatpush1.msra.mxu0 %v1522
  %1524 = vmatprep.subr.mxu0 0.0
  %v1525 = vand.u32 %v1060, 4294901760
  %v1526 = vsub.f32 %v1060, %v1525
  %1527 = vmatpush1.msra.mxu0 %v1526
  %1528 = vmatprep.subr.mxu0 0.0
  %v1529 = vand.u32 %v1061, 4294901760
  %v1530 = vsub.f32 %v1061, %v1529
  %1531 = vmatpush1.msra.mxu0 %v1530
  %1532 = vmatprep.subr.mxu0 0.0
  %v1533 = vand.u32 %v1062, 4294901760
  %v1534 = vsub.f32 %v1062, %v1533
  %1535 = vmatpush1.msra.mxu0 %v1534
  %1536 = vmatprep.subr.mxu0 0.0
  %v1537 = vand.u32 %v1063, 4294901760
  %v1538 = vsub.f32 %v1063, %v1537
  %1539 = vmatpush1.msra.mxu0 %v1538
  %1540 = vmatprep.subr.mxu0 0.0
  %v1541 = vand.u32 %v1064, 4294901760
  %v1542 = vsub.f32 %v1064, %v1541
  %1543 = vmatpush1.msra.mxu0 %v1542
  %1544 = vmatprep.subr.mxu0 0.0
  %v1545 = vand.u32 %v1065, 4294901760
  %v1546 = vsub.f32 %v1065, %v1545
  %1547 = vmatpush1.msra.mxu0 %v1546
  %1548 = vmatprep.subr.mxu0 0.0
  %v1549 = vand.u32 %v1066, 4294901760
  %v1550 = vsub.f32 %v1066, %v1549
  %1551 = vmatpush1.msra.mxu0 %v1550
  %1552 = vmatprep.subr.mxu0 0.0
  %v1553 = vand.u32 %v1067, 4294901760
  %v1554 = vsub.f32 %v1067, %v1553
  %1555 = vmatpush1.msra.mxu0 %v1554
  %1556 = vmatprep.subr.mxu0 0.0
  %v1557 = vand.u32 %v1068, 4294901760
  %v1558 = vsub.f32 %v1068, %v1557
  %1559 = vmatpush1.msra.mxu0 %v1558
  %1560 = vmatprep.subr.mxu0 0.0
  %v1561 = vand.u32 %v1069, 4294901760
  %v1562 = vsub.f32 %v1069, %v1561
  %1563 = vmatpush1.msra.mxu0 %v1562
  %1564 = vmatprep.subr.mxu0 0.0
  %v1565 = vand.u32 %v1070, 4294901760
  %v1566 = vsub.f32 %v1070, %v1565
  %1567 = vmatpush1.msra.mxu0 %v1566
  %1568 = vmatprep.subr.mxu0 0.0
  %v1569 = vand.u32 %v1071, 4294901760
  %v1570 = vsub.f32 %v1071, %v1569
  %1571 = vmatpush1.msra.mxu0 %v1570
  %1572 = vmatprep.subr.mxu0 0.0
  %v1573 = vand.u32 %v1072, 4294901760
  %v1574 = vsub.f32 %v1072, %v1573
  %1575 = vmatpush1.msra.mxu0 %v1574
  %1576 = vmatprep.subr.mxu0 0.0
  %v1577 = vand.u32 %v1073, 4294901760
  %v1578 = vsub.f32 %v1073, %v1577
  %1579 = vmatpush1.msra.mxu0 %v1578
  %v1580 = vand.u32 %v1039, 4294901760
  %v1581 = vsub.f32 %v1039, %v1580
  %1582 = vmatprep.mubr.f32.mxu0 %v1581
  %v1583 = vand.u32 %v1038, 4294901760
  %v1584 = vsub.f32 %v1038, %v1583
  %1585 = vmatmul.mubr.f32.gmra.mrb[0].mxu0 %v1584
  %v1586 = vpop.f32.mrb[0].mxu0
  %v1587 = vadd.f32 %v1449, %v1586
  %v1588 = vpop.f32.mrb[0].mxu0
  %1589 = vdwg.mxu0
  %1590 = vmatprep.subr.mxu0 0.0
  %v1591 = vand.u32 %v1042, 4294901760
  %1592 = vmatpush1.msra.mxu0 %v1591
  %1593 = vmatprep.subr.mxu0 0.0
  %v1594 = vand.u32 %v1043, 4294901760
  %1595 = vmatpush1.msra.mxu0 %v1594
  %1596 = vmatprep.subr.mxu0 0.0
  %v1597 = vand.u32 %v1044, 4294901760
  %1598 = vmatpush1.msra.mxu0 %v1597
  %1599 = vmatprep.subr.mxu0 0.0
  %v1600 = vand.u32 %v1045, 4294901760
  %1601 = vmatpush1.msra.mxu0 %v1600
  %1602 = vmatprep.subr.mxu0 0.0
  %v1603 = vand.u32 %v1046, 4294901760
  %1604 = vmatpush1.msra.mxu0 %v1603
  %1605 = vmatprep.subr.mxu0 0.0
  %v1606 = vand.u32 %v1047, 4294901760
  %1607 = vmatpush1.msra.mxu0 %v1606
  %1608 = vmatprep.subr.mxu0 0.0
  %v1609 = vand.u32 %v1048, 4294901760
  %1610 = vmatpush1.msra.mxu0 %v1609
  %1611 = vmatprep.subr.mxu0 0.0
  %v1612 = vand.u32 %v1049, 4294901760
  %1613 = vmatpush1.msra.mxu0 %v1612
  %1614 = vmatprep.subr.mxu0 0.0
  %v1615 = vand.u32 %v1050, 4294901760
  %1616 = vmatpush1.msra.mxu0 %v1615
  %1617 = vmatprep.subr.mxu0 0.0
  %v1618 = vand.u32 %v1051, 4294901760
  %1619 = vmatpush1.msra.mxu0 %v1618
  %1620 = vmatprep.subr.mxu0 0.0
  %v1621 = vand.u32 %v1052, 4294901760
  %1622 = vmatpush1.msra.mxu0 %v1621
  %1623 = vmatprep.subr.mxu0 0.0
  %v1624 = vand.u32 %v1053, 4294901760
  %1625 = vmatpush1.msra.mxu0 %v1624
  %1626 = vmatprep.subr.mxu0 0.0
  %v1627 = vand.u32 %v1054, 4294901760
  %1628 = vmatpush1.msra.mxu0 %v1627
  %1629 = vmatprep.subr.mxu0 0.0
  %v1630 = vand.u32 %v1055, 4294901760
  %1631 = vmatpush1.msra.mxu0 %v1630
  %1632 = vmatprep.subr.mxu0 0.0
  %v1633 = vand.u32 %v1056, 4294901760
  %1634 = vmatpush1.msra.mxu0 %v1633
  %1635 = vmatprep.subr.mxu0 0.0
  %v1636 = vand.u32 %v1057, 4294901760
  %1637 = vmatpush1.msra.mxu0 %v1636
  %1638 = vmatprep.subr.mxu0 0.0
  %v1639 = vand.u32 %v1058, 4294901760
  %1640 = vmatpush1.msra.mxu0 %v1639
  %1641 = vmatprep.subr.mxu0 0.0
  %v1642 = vand.u32 %v1059, 4294901760
  %1643 = vmatpush1.msra.mxu0 %v1642
  %1644 = vmatprep.subr.mxu0 0.0
  %v1645 = vand.u32 %v1060, 4294901760
  %1646 = vmatpush1.msra.mxu0 %v1645
  %1647 = vmatprep.subr.mxu0 0.0
  %v1648 = vand.u32 %v1061, 4294901760
  %1649 = vmatpush1.msra.mxu0 %v1648
  %1650 = vmatprep.subr.mxu0 0.0
  %v1651 = vand.u32 %v1062, 4294901760
  %1652 = vmatpush1.msra.mxu0 %v1651
  %1653 = vmatprep.subr.mxu0 0.0
  %v1654 = vand.u32 %v1063, 4294901760
  %1655 = vmatpush1.msra.mxu0 %v1654
  %1656 = vmatprep.subr.mxu0 0.0
  %v1657 = vand.u32 %v1064, 4294901760
  %1658 = vmatpush1.msra.mxu0 %v1657
  %1659 = vmatprep.subr.mxu0 0.0
  %v1660 = vand.u32 %v1065, 4294901760
  %1661 = vmatpush1.msra.mxu0 %v1660
  %1662 = vmatprep.subr.mxu0 0.0
  %v1663 = vand.u32 %v1066, 4294901760
  %1664 = vmatpush1.msra.mxu0 %v1663
  %1665 = vmatprep.subr.mxu0 0.0
  %v1666 = vand.u32 %v1067, 4294901760
  %1667 = vmatpush1.msra.mxu0 %v1666
  %1668 = vmatprep.subr.mxu0 0.0
  %v1669 = vand.u32 %v1068, 4294901760
  %1670 = vmatpush1.msra.mxu0 %v1669
  %1671 = vmatprep.subr.mxu0 0.0
  %v1672 = vand.u32 %v1069, 4294901760
  %1673 = vmatpush1.msra.mxu0 %v1672
  %1674 = vmatprep.subr.mxu0 0.0
  %v1675 = vand.u32 %v1070, 4294901760
  %1676 = vmatpush1.msra.mxu0 %v1675
  %1677 = vmatprep.subr.mxu0 0.0
  %v1678 = vand.u32 %v1071, 4294901760
  %1679 = vmatpush1.msra.mxu0 %v1678
  %1680 = vmatprep.subr.mxu0 0.0
  %v1681 = vand.u32 %v1072, 4294901760
  %1682 = vmatpush1.msra.mxu0 %v1681
  %1683 = vmatprep.subr.mxu0 0.0
  %v1684 = vand.u32 %v1073, 4294901760
  %1685 = vmatpush1.msra.mxu0 %v1684
  %v1686 = vand.u32 %v1039, 4294901760
  %v1687 = vsub.f32 %v1039, %v1686
  %v1688 = vand.u32 %v1687, 4294901760
  %1689 = vmatprep.mubr.f32.mxu0 %v1688
  %v1690 = vand.u32 %v1038, 4294901760
  %v1691 = vsub.f32 %v1038, %v1690
  %v1692 = vand.u32 %v1691, 4294901760
  %1693 = vmatmul.mubr.f32.gmra.mrb[0].mxu0 %v1692
  %v1694 = vpop.f32.mrb[0].mxu0
  %v1695 = vadd.f32 %v1587, %v1694
  %v1696 = vpop.f32.mrb[0].mxu0
  %1697 = vdwg.mxu0
  %1698 = vmatprep.subr.mxu0 0.0
  %v1699 = vand.u32 %v1042, 4294901760
  %v1700 = vsub.f32 %v1042, %v1699
  %v1701 = vand.u32 %v1700, 4294901760
  %1702 = vmatpush1.msra.mxu0 %v1701
  %1703 = vmatprep.subr.mxu0 0.0
  %v1704 = vand.u32 %v1043, 4294901760
  %v1705 = vsub.f32 %v1043, %v1704
  %v1706 = vand.u32 %v1705, 4294901760
  %1707 = vmatpush1.msra.mxu0 %v1706
  %1708 = vmatprep.subr.mxu0 0.0
  %v1709 = vand.u32 %v1044, 4294901760
  %v1710 = vsub.f32 %v1044, %v1709
  %v1711 = vand.u32 %v1710, 4294901760
  %1712 = vmatpush1.msra.mxu0 %v1711
  %1713 = vmatprep.subr.mxu0 0.0
  %v1714 = vand.u32 %v1045, 4294901760
  %v1715 = vsub.f32 %v1045, %v1714
  %v1716 = vand.u32 %v1715, 4294901760
  %1717 = vmatpush1.msra.mxu0 %v1716
  %1718 = vmatprep.subr.mxu0 0.0
  %v1719 = vand.u32 %v1046, 4294901760
  %v1720 = vsub.f32 %v1046, %v1719
  %v1721 = vand.u32 %v1720, 4294901760
  %1722 = vmatpush1.msra.mxu0 %v1721
  %1723 = vmatprep.subr.mxu0 0.0
  %v1724 = vand.u32 %v1047, 4294901760
  %v1725 = vsub.f32 %v1047, %v1724
  %v1726 = vand.u32 %v1725, 4294901760
  %1727 = vmatpush1.msra.mxu0 %v1726
  %1728 = vmatprep.subr.mxu0 0.0
  %v1729 = vand.u32 %v1048, 4294901760
  %v1730 = vsub.f32 %v1048, %v1729
  %v1731 = vand.u32 %v1730, 4294901760
  %1732 = vmatpush1.msra.mxu0 %v1731
  %1733 = vmatprep.subr.mxu0 0.0
  %v1734 = vand.u32 %v1049, 4294901760
  %v1735 = vsub.f32 %v1049, %v1734
  %v1736 = vand.u32 %v1735, 4294901760
  %1737 = vmatpush1.msra.mxu0 %v1736
  %1738 = vmatprep.subr.mxu0 0.0
  %v1739 = vand.u32 %v1050, 4294901760
  %v1740 = vsub.f32 %v1050, %v1739
  %v1741 = vand.u32 %v1740, 4294901760
  %1742 = vmatpush1.msra.mxu0 %v1741
  %1743 = vmatprep.subr.mxu0 0.0
  %v1744 = vand.u32 %v1051, 4294901760
  %v1745 = vsub.f32 %v1051, %v1744
  %v1746 = vand.u32 %v1745, 4294901760
  %1747 = vmatpush1.msra.mxu0 %v1746
  %1748 = vmatprep.subr.mxu0 0.0
  %v1749 = vand.u32 %v1052, 4294901760
  %v1750 = vsub.f32 %v1052, %v1749
  %v1751 = vand.u32 %v1750, 4294901760
  %1752 = vmatpush1.msra.mxu0 %v1751
  %1753 = vmatprep.subr.mxu0 0.0
  %v1754 = vand.u32 %v1053, 4294901760
  %v1755 = vsub.f32 %v1053, %v1754
  %v1756 = vand.u32 %v1755, 4294901760
  %1757 = vmatpush1.msra.mxu0 %v1756
  %1758 = vmatprep.subr.mxu0 0.0
  %v1759 = vand.u32 %v1054, 4294901760
  %v1760 = vsub.f32 %v1054, %v1759
  %v1761 = vand.u32 %v1760, 4294901760
  %1762 = vmatpush1.msra.mxu0 %v1761
  %1763 = vmatprep.subr.mxu0 0.0
  %v1764 = vand.u32 %v1055, 4294901760
  %v1765 = vsub.f32 %v1055, %v1764
  %v1766 = vand.u32 %v1765, 4294901760
  %1767 = vmatpush1.msra.mxu0 %v1766
  %1768 = vmatprep.subr.mxu0 0.0
  %v1769 = vand.u32 %v1056, 4294901760
  %v1770 = vsub.f32 %v1056, %v1769
  %v1771 = vand.u32 %v1770, 4294901760
  %1772 = vmatpush1.msra.mxu0 %v1771
  %1773 = vmatprep.subr.mxu0 0.0
  %v1774 = vand.u32 %v1057, 4294901760
  %v1775 = vsub.f32 %v1057, %v1774
  %v1776 = vand.u32 %v1775, 4294901760
  %1777 = vmatpush1.msra.mxu0 %v1776
  %1778 = vmatprep.subr.mxu0 0.0
  %v1779 = vand.u32 %v1058, 4294901760
  %v1780 = vsub.f32 %v1058, %v1779
  %v1781 = vand.u32 %v1780, 4294901760
  %1782 = vmatpush1.msra.mxu0 %v1781
  %1783 = vmatprep.subr.mxu0 0.0
  %v1784 = vand.u32 %v1059, 4294901760
  %v1785 = vsub.f32 %v1059, %v1784
  %v1786 = vand.u32 %v1785, 4294901760
  %1787 = vmatpush1.msra.mxu0 %v1786
  %1788 = vmatprep.subr.mxu0 0.0
  %v1789 = vand.u32 %v1060, 4294901760
  %v1790 = vsub.f32 %v1060, %v1789
  %v1791 = vand.u32 %v1790, 4294901760
  %1792 = vmatpush1.msra.mxu0 %v1791
  %1793 = vmatprep.subr.mxu0 0.0
  %v1794 = vand.u32 %v1061, 4294901760
  %v1795 = vsub.f32 %v1061, %v1794
  %v1796 = vand.u32 %v1795, 4294901760
  %1797 = vmatpush1.msra.mxu0 %v1796
  %1798 = vmatprep.subr.mxu0 0.0
  %v1799 = vand.u32 %v1062, 4294901760
  %v1800 = vsub.f32 %v1062, %v1799
  %v1801 = vand.u32 %v1800, 4294901760
  %1802 = vmatpush1.msra.mxu0 %v1801
  %1803 = vmatprep.subr.mxu0 0.0
  %v1804 = vand.u32 %v1063, 4294901760
  %v1805 = vsub.f32 %v1063, %v1804
  %v1806 = vand.u32 %v1805, 4294901760
  %1807 = vmatpush1.msra.mxu0 %v1806
  %1808 = vmatprep.subr.mxu0 0.0
  %v1809 = vand.u32 %v1064, 4294901760
  %v1810 = vsub.f32 %v1064, %v1809
  %v1811 = vand.u32 %v1810, 4294901760
  %1812 = vmatpush1.msra.mxu0 %v1811
  %1813 = vmatprep.subr.mxu0 0.0
  %v1814 = vand.u32 %v1065, 4294901760
  %v1815 = vsub.f32 %v1065, %v1814
  %v1816 = vand.u32 %v1815, 4294901760
  %1817 = vmatpush1.msra.mxu0 %v1816
  %1818 = vmatprep.subr.mxu0 0.0
  %v1819 = vand.u32 %v1066, 4294901760
  %v1820 = vsub.f32 %v1066, %v1819
  %v1821 = vand.u32 %v1820, 4294901760
  %1822 = vmatpush1.msra.mxu0 %v1821
  %1823 = vmatprep.subr.mxu0 0.0
  %v1824 = vand.u32 %v1067, 4294901760
  %v1825 = vsub.f32 %v1067, %v1824
  %v1826 = vand.u32 %v1825, 4294901760
  %1827 = vmatpush1.msra.mxu0 %v1826
  %1828 = vmatprep.subr.mxu0 0.0
  %v1829 = vand.u32 %v1068, 4294901760
  %v1830 = vsub.f32 %v1068, %v1829
  %v1831 = vand.u32 %v1830, 4294901760
  %1832 = vmatpush1.msra.mxu0 %v1831
  %1833 = vmatprep.subr.mxu0 0.0
  %v1834 = vand.u32 %v1069, 4294901760
  %v1835 = vsub.f32 %v1069, %v1834
  %v1836 = vand.u32 %v1835, 4294901760
  %1837 = vmatpush1.msra.mxu0 %v1836
  %1838 = vmatprep.subr.mxu0 0.0
  %v1839 = vand.u32 %v1070, 4294901760
  %v1840 = vsub.f32 %v1070, %v1839
  %v1841 = vand.u32 %v1840, 4294901760
  %1842 = vmatpush1.msra.mxu0 %v1841
  %1843 = vmatprep.subr.mxu0 0.0
  %v1844 = vand.u32 %v1071, 4294901760
  %v1845 = vsub.f32 %v1071, %v1844
  %v1846 = vand.u32 %v1845, 4294901760
  %1847 = vmatpush1.msra.mxu0 %v1846
  %1848 = vmatprep.subr.mxu0 0.0
  %v1849 = vand.u32 %v1072, 4294901760
  %v1850 = vsub.f32 %v1072, %v1849
  %v1851 = vand.u32 %v1850, 4294901760
  %1852 = vmatpush1.msra.mxu0 %v1851
  %1853 = vmatprep.subr.mxu0 0.0
  %v1854 = vand.u32 %v1073, 4294901760
  %v1855 = vsub.f32 %v1073, %v1854
  %v1856 = vand.u32 %v1855, 4294901760
  %1857 = vmatpush1.msra.mxu0 %v1856
  %v1858 = vand.u32 %v1039, 4294901760
  %1859 = vmatprep.mubr.f32.mxu0 %v1858
  %v1860 = vand.u32 %v1038, 4294901760
  %1861 = vmatmul.mubr.f32.gmra.mrb[0].mxu0 %v1860
  %v1862 = vpop.f32.mrb[0].mxu0
  %v1863 = vadd.f32 %v1695, %v1862
  %v1864 = vpop.f32.mrb[0].mxu0
  %1865 = vdwg.mxu0
  %1866 = vmatprep.subr.mxu0 0.0
  %v1867 = vand.u32 %v1042, 4294901760
  %1868 = vmatpush1.msra.mxu0 %v1867
  %1869 = vmatprep.subr.mxu0 0.0
  %v1870 = vand.u32 %v1043, 4294901760
  %1871 = vmatpush1.msra.mxu0 %v1870
  %1872 = vmatprep.subr.mxu0 0.0
  %v1873 = vand.u32 %v1044, 4294901760
  %1874 = vmatpush1.msra.mxu0 %v1873
  %1875 = vmatprep.subr.mxu0 0.0
  %v1876 = vand.u32 %v1045, 4294901760
  %1877 = vmatpush1.msra.mxu0 %v1876
  %1878 = vmatprep.subr.mxu0 0.0
  %v1879 = vand.u32 %v1046, 4294901760
  %1880 = vmatpush1.msra.mxu0 %v1879
  %1881 = vmatprep.subr.mxu0 0.0
  %v1882 = vand.u32 %v1047, 4294901760
  %1883 = vmatpush1.msra.mxu0 %v1882
  %1884 = vmatprep.subr.mxu0 0.0
  %v1885 = vand.u32 %v1048, 4294901760
  %1886 = vmatpush1.msra.mxu0 %v1885
  %1887 = vmatprep.subr.mxu0 0.0
  %v1888 = vand.u32 %v1049, 4294901760
  %1889 = vmatpush1.msra.mxu0 %v1888
  %1890 = vmatprep.subr.mxu0 0.0
  %v1891 = vand.u32 %v1050, 4294901760
  %1892 = vmatpush1.msra.mxu0 %v1891
  %1893 = vmatprep.subr.mxu0 0.0
  %v1894 = vand.u32 %v1051, 4294901760
  %1895 = vmatpush1.msra.mxu0 %v1894
  %1896 = vmatprep.subr.mxu0 0.0
  %v1897 = vand.u32 %v1052, 4294901760
  %1898 = vmatpush1.msra.mxu0 %v1897
  %1899 = vmatprep.subr.mxu0 0.0
  %v1900 = vand.u32 %v1053, 4294901760
  %1901 = vmatpush1.msra.mxu0 %v1900
  %1902 = vmatprep.subr.mxu0 0.0
  %v1903 = vand.u32 %v1054, 4294901760
  %1904 = vmatpush1.msra.mxu0 %v1903
  %1905 = vmatprep.subr.mxu0 0.0
  %v1906 = vand.u32 %v1055, 4294901760
  %1907 = vmatpush1.msra.mxu0 %v1906
  %1908 = vmatprep.subr.mxu0 0.0
  %v1909 = vand.u32 %v1056, 4294901760
  %1910 = vmatpush1.msra.mxu0 %v1909
  %1911 = vmatprep.subr.mxu0 0.0
  %v1912 = vand.u32 %v1057, 4294901760
  %1913 = vmatpush1.msra.mxu0 %v1912
  %1914 = vmatprep.subr.mxu0 0.0
  %v1915 = vand.u32 %v1058, 4294901760
  %1916 = vmatpush1.msra.mxu0 %v1915
  %1917 = vmatprep.subr.mxu0 0.0
  %v1918 = vand.u32 %v1059, 4294901760
  %1919 = vmatpush1.msra.mxu0 %v1918
  %1920 = vmatprep.subr.mxu0 0.0
  %v1921 = vand.u32 %v1060, 4294901760
  %1922 = vmatpush1.msra.mxu0 %v1921
  %1923 = vmatprep.subr.mxu0 0.0
  %v1924 = vand.u32 %v1061, 4294901760
  %1925 = vmatpush1.msra.mxu0 %v1924
  %1926 = vmatprep.subr.mxu0 0.0
  %v1927 = vand.u32 %v1062, 4294901760
  %1928 = vmatpush1.msra.mxu0 %v1927
  %1929 = vmatprep.subr.mxu0 0.0
  %v1930 = vand.u32 %v1063, 4294901760
  %1931 = vmatpush1.msra.mxu0 %v1930
  %1932 = vmatprep.subr.mxu0 0.0
  %v1933 = vand.u32 %v1064, 4294901760
  %1934 = vmatpush1.msra.mxu0 %v1933
  %1935 = vmatprep.subr.mxu0 0.0
  %v1936 = vand.u32 %v1065, 4294901760
  %1937 = vmatpush1.msra.mxu0 %v1936
  %1938 = vmatprep.subr.mxu0 0.0
  %v1939 = vand.u32 %v1066, 4294901760
  %1940 = vmatpush1.msra.mxu0 %v1939
  %1941 = vmatprep.subr.mxu0 0.0
  %v1942 = vand.u32 %v1067, 4294901760
  %1943 = vmatpush1.msra.mxu0 %v1942
  %1944 = vmatprep.subr.mxu0 0.0
  %v1945 = vand.u32 %v1068, 4294901760
  %1946 = vmatpush1.msra.mxu0 %v1945
  %1947 = vmatprep.subr.mxu0 0.0
  %v1948 = vand.u32 %v1069, 4294901760
  %1949 = vmatpush1.msra.mxu0 %v1948
  %1950 = vmatprep.subr.mxu0 0.0
  %v1951 = vand.u32 %v1070, 4294901760
  %1952 = vmatpush1.msra.mxu0 %v1951
  %1953 = vmatprep.subr.mxu0 0.0
  %v1954 = vand.u32 %v1071, 4294901760
  %1955 = vmatpush1.msra.mxu0 %v1954
  %1956 = vmatprep.subr.mxu0 0.0
  %v1957 = vand.u32 %v1072, 4294901760
  %1958 = vmatpush1.msra.mxu0 %v1957
  %1959 = vmatprep.subr.mxu0 0.0
  %v1960 = vand.u32 %v1073, 4294901760
  %1961 = vmatpush1.msra.mxu0 %v1960
  %v1962 = vand.u32 %v1039, 4294901760
  %1963 = vmatprep.mubr.f32.mxu0 %v1962
  %v1964 = vand.u32 %v1038, 4294901760
  %1965 = vmatmul.mubr.f32.gmra.mrb[0].mxu0 %v1964
  %v1966 = vpop.f32.mrb[0].mxu0
  %v1967 = vadd.f32 %v1863, %v1966
  %v1968 = vpop.f32.mrb[0].mxu0
  %1969 = vdwg.mxu0
  %1970 = vmatprep.subr.mxu0 0.0
  %v1971 = vand.u32 %v1074, 4294901760
  %1972 = vmatpush1.msra.mxu0 %v1971
  %1973 = vmatprep.subr.mxu0 0.0
  %v1974 = vand.u32 %v1075, 4294901760
  %1975 = vmatpush1.msra.mxu0 %v1974
  %1976 = vmatprep.subr.mxu0 0.0
  %v1977 = vand.u32 %v1076, 4294901760
  %1978 = vmatpush1.msra.mxu0 %v1977
  %1979 = vmatprep.subr.mxu0 0.0
  %v1980 = vand.u32 %v1077, 4294901760
  %1981 = vmatpush1.msra.mxu0 %v1980
  %1982 = vmatprep.subr.mxu0 0.0
  %v1983 = vand.u32 %v1078, 4294901760
  %1984 = vmatpush1.msra.mxu0 %v1983
  %1985 = vmatprep.subr.mxu0 0.0
  %v1986 = vand.u32 %v1079, 4294901760
  %1987 = vmatpush1.msra.mxu0 %v1986
  %1988 = vmatprep.subr.mxu0 0.0
  %v1989 = vand.u32 %v1080, 4294901760
  %1990 = vmatpush1.msra.mxu0 %v1989
  %1991 = vmatprep.subr.mxu0 0.0
  %v1992 = vand.u32 %v1081, 4294901760
  %1993 = vmatpush1.msra.mxu0 %v1992
  %1994 = vmatprep.subr.mxu0 0.0
  %v1995 = vand.u32 %v1082, 4294901760
  %1996 = vmatpush1.msra.mxu0 %v1995
  %1997 = vmatprep.subr.mxu0 0.0
  %v1998 = vand.u32 %v1083, 4294901760
  %1999 = vmatpush1.msra.mxu0 %v1998
  %2000 = vmatprep.subr.mxu0 0.0
  %v2001 = vand.u32 %v1084, 4294901760
  %2002 = vmatpush1.msra.mxu0 %v2001
  %2003 = vmatprep.subr.mxu0 0.0
  %v2004 = vand.u32 %v1085, 4294901760
  %2005 = vmatpush1.msra.mxu0 %v2004
  %2006 = vmatprep.subr.mxu0 0.0
  %v2007 = vand.u32 %v1086, 4294901760
  %2008 = vmatpush1.msra.mxu0 %v2007
  %2009 = vmatprep.subr.mxu0 0.0
  %v2010 = vand.u32 %v1087, 4294901760
  %2011 = vmatpush1.msra.mxu0 %v2010
  %2012 = vmatprep.subr.mxu0 0.0
  %v2013 = vand.u32 %v1088, 4294901760
  %2014 = vmatpush1.msra.mxu0 %v2013
  %2015 = vmatprep.subr.mxu0 0.0
  %v2016 = vand.u32 %v1089, 4294901760
  %2017 = vmatpush1.msra.mxu0 %v2016
  %2018 = vmatprep.subr.mxu0 0.0
  %v2019 = vand.u32 %v1090, 4294901760
  %2020 = vmatpush1.msra.mxu0 %v2019
  %2021 = vmatprep.subr.mxu0 0.0
  %v2022 = vand.u32 %v1091, 4294901760
  %2023 = vmatpush1.msra.mxu0 %v2022
  %2024 = vmatprep.subr.mxu0 0.0
  %v2025 = vand.u32 %v1092, 4294901760
  %2026 = vmatpush1.msra.mxu0 %v2025
  %2027 = vmatprep.subr.mxu0 0.0
  %v2028 = vand.u32 %v1093, 4294901760
  %2029 = vmatpush1.msra.mxu0 %v2028
  %2030 = vmatprep.subr.mxu0 0.0
  %v2031 = vand.u32 %v1094, 4294901760
  %2032 = vmatpush1.msra.mxu0 %v2031
  %2033 = vmatprep.subr.mxu0 0.0
  %v2034 = vand.u32 %v1095, 4294901760
  %2035 = vmatpush1.msra.mxu0 %v2034
  %2036 = vmatprep.subr.mxu0 0.0
  %v2037 = vand.u32 %v1096, 4294901760
  %2038 = vmatpush1.msra.mxu0 %v2037
  %2039 = vmatprep.subr.mxu0 0.0
  %v2040 = vand.u32 %v1097, 4294901760
  %2041 = vmatpush1.msra.mxu0 %v2040
  %2042 = vmatprep.subr.mxu0 0.0
  %v2043 = vand.u32 %v1098, 4294901760
  %2044 = vmatpush1.msra.mxu0 %v2043
  %2045 = vmatprep.subr.mxu0 0.0
  %v2046 = vand.u32 %v1099, 4294901760
  %2047 = vmatpush1.msra.mxu0 %v2046
  %2048 = vmatprep.subr.mxu0 0.0
  %v2049 = vand.u32 %v1100, 4294901760
  %2050 = vmatpush1.msra.mxu0 %v2049
  %2051 = vmatprep.subr.mxu0 0.0
  %v2052 = vand.u32 %v1101, 4294901760
  %2053 = vmatpush1.msra.mxu0 %v2052
  %2054 = vmatprep.subr.mxu0 0.0
  %v2055 = vand.u32 %v1102, 4294901760
  %2056 = vmatpush1.msra.mxu0 %v2055
  %2057 = vmatprep.subr.mxu0 0.0
  %v2058 = vand.u32 %v1103, 4294901760
  %2059 = vmatpush1.msra.mxu0 %v2058
  %2060 = vmatprep.subr.mxu0 0.0
  %v2061 = vand.u32 %v1104, 4294901760
  %2062 = vmatpush1.msra.mxu0 %v2061
  %2063 = vmatprep.subr.mxu0 0.0
  %v2064 = vand.u32 %v1105, 4294901760
  %2065 = vmatpush1.msra.mxu0 %v2064
  %v2066 = vand.u32 %v1041, 4294901760
  %v2067 = vsub.f32 %v1041, %v2066
  %v2068 = vand.u32 %v2067, 4294901760
  %v2069 = vsub.f32 %v2067, %v2068
  %v2070 = vand.u32 %v2069, 4294901760
  %2071 = vmatprep.mubr.f32.mxu0 %v2070
  %v2072 = vand.u32 %v1040, 4294901760
  %v2073 = vsub.f32 %v1040, %v2072
  %v2074 = vand.u32 %v2073, 4294901760
  %v2075 = vsub.f32 %v2073, %v2074
  %v2076 = vand.u32 %v2075, 4294901760
  %2077 = vmatmul.mubr.f32.gmra.mrb[0].mxu0 %v2076
  %v2078 = vpop.f32.mrb[0].mxu0
  %v2079 = vadd.f32 %v1967, %v2078
  %v2080 = vpop.f32.mrb[0].mxu0
  %2081 = vdwg.mxu0
  %2082 = vmatprep.subr.mxu0 0.0
  %v2083 = vand.u32 %v1074, 4294901760
  %v2084 = vsub.f32 %v1074, %v2083
  %v2085 = vand.u32 %v2084, 4294901760
  %v2086 = vsub.f32 %v2084, %v2085
  %v2087 = vand.u32 %v2086, 4294901760
  %2088 = vmatpush1.msra.mxu0 %v2087
  %2089 = vmatprep.subr.mxu0 0.0
  %v2090 = vand.u32 %v1075, 4294901760
  %v2091 = vsub.f32 %v1075, %v2090
  %v2092 = vand.u32 %v2091, 4294901760
  %v2093 = vsub.f32 %v2091, %v2092
  %v2094 = vand.u32 %v2093, 4294901760
  %2095 = vmatpush1.msra.mxu0 %v2094
  %2096 = vmatprep.subr.mxu0 0.0
  %v2097 = vand.u32 %v1076, 4294901760
  %v2098 = vsub.f32 %v1076, %v2097
  %v2099 = vand.u32 %v2098, 4294901760
  %v2100 = vsub.f32 %v2098, %v2099
  %v2101 = vand.u32 %v2100, 4294901760
  %2102 = vmatpush1.msra.mxu0 %v2101
  %2103 = vmatprep.subr.mxu0 0.0
  %v2104 = vand.u32 %v1077, 4294901760
  %v2105 = vsub.f32 %v1077, %v2104
  %v2106 = vand.u32 %v2105, 4294901760
  %v2107 = vsub.f32 %v2105, %v2106
  %v2108 = vand.u32 %v2107, 4294901760
  %2109 = vmatpush1.msra.mxu0 %v2108
  %2110 = vmatprep.subr.mxu0 0.0
  %v2111 = vand.u32 %v1078, 4294901760
  %v2112 = vsub.f32 %v1078, %v2111
  %v2113 = vand.u32 %v2112, 4294901760
  %v2114 = vsub.f32 %v2112, %v2113
  %v2115 = vand.u32 %v2114, 4294901760
  %2116 = vmatpush1.msra.mxu0 %v2115
  %2117 = vmatprep.subr.mxu0 0.0
  %v2118 = vand.u32 %v1079, 4294901760
  %v2119 = vsub.f32 %v1079, %v2118
  %v2120 = vand.u32 %v2119, 4294901760
  %v2121 = vsub.f32 %v2119, %v2120
  %v2122 = vand.u32 %v2121, 4294901760
  %2123 = vmatpush1.msra.mxu0 %v2122
  %2124 = vmatprep.subr.mxu0 0.0
  %v2125 = vand.u32 %v1080, 4294901760
  %v2126 = vsub.f32 %v1080, %v2125
  %v2127 = vand.u32 %v2126, 4294901760
  %v2128 = vsub.f32 %v2126, %v2127
  %v2129 = vand.u32 %v2128, 4294901760
  %2130 = vmatpush1.msra.mxu0 %v2129
  %2131 = vmatprep.subr.mxu0 0.0
  %v2132 = vand.u32 %v1081, 4294901760
  %v2133 = vsub.f32 %v1081, %v2132
  %v2134 = vand.u32 %v2133, 4294901760
  %v2135 = vsub.f32 %v2133, %v2134
  %v2136 = vand.u32 %v2135, 4294901760
  %2137 = vmatpush1.msra.mxu0 %v2136
  %2138 = vmatprep.subr.mxu0 0.0
  %v2139 = vand.u32 %v1082, 4294901760
  %v2140 = vsub.f32 %v1082, %v2139
  %v2141 = vand.u32 %v2140, 4294901760
  %v2142 = vsub.f32 %v2140, %v2141
  %v2143 = vand.u32 %v2142, 4294901760
  %2144 = vmatpush1.msra.mxu0 %v2143
  %2145 = vmatprep.subr.mxu0 0.0
  %v2146 = vand.u32 %v1083, 4294901760
  %v2147 = vsub.f32 %v1083, %v2146
  %v2148 = vand.u32 %v2147, 4294901760
  %v2149 = vsub.f32 %v2147, %v2148
  %v2150 = vand.u32 %v2149, 4294901760
  %2151 = vmatpush1.msra.mxu0 %v2150
  %2152 = vmatprep.subr.mxu0 0.0
  %v2153 = vand.u32 %v1084, 4294901760
  %v2154 = vsub.f32 %v1084, %v2153
  %v2155 = vand.u32 %v2154, 4294901760
  %v2156 = vsub.f32 %v2154, %v2155
  %v2157 = vand.u32 %v2156, 4294901760
  %2158 = vmatpush1.msra.mxu0 %v2157
  %2159 = vmatprep.subr.mxu0 0.0
  %v2160 = vand.u32 %v1085, 4294901760
  %v2161 = vsub.f32 %v1085, %v2160
  %v2162 = vand.u32 %v2161, 4294901760
  %v2163 = vsub.f32 %v2161, %v2162
  %v2164 = vand.u32 %v2163, 4294901760
  %2165 = vmatpush1.msra.mxu0 %v2164
  %2166 = vmatprep.subr.mxu0 0.0
  %v2167 = vand.u32 %v1086, 4294901760
  %v2168 = vsub.f32 %v1086, %v2167
  %v2169 = vand.u32 %v2168, 4294901760
  %v2170 = vsub.f32 %v2168, %v2169
  %v2171 = vand.u32 %v2170, 4294901760
  %2172 = vmatpush1.msra.mxu0 %v2171
  %2173 = vmatprep.subr.mxu0 0.0
  %v2174 = vand.u32 %v1087, 4294901760
  %v2175 = vsub.f32 %v1087, %v2174
  %v2176 = vand.u32 %v2175, 4294901760
  %v2177 = vsub.f32 %v2175, %v2176
  %v2178 = vand.u32 %v2177, 4294901760
  %2179 = vmatpush1.msra.mxu0 %v2178
  %2180 = vmatprep.subr.mxu0 0.0
  %v2181 = vand.u32 %v1088, 4294901760
  %v2182 = vsub.f32 %v1088, %v2181
  %v2183 = vand.u32 %v2182, 4294901760
  %v2184 = vsub.f32 %v2182, %v2183
  %v2185 = vand.u32 %v2184, 4294901760
  %2186 = vmatpush1.msra.mxu0 %v2185
  %2187 = vmatprep.subr.mxu0 0.0
  %v2188 = vand.u32 %v1089, 4294901760
  %v2189 = vsub.f32 %v1089, %v2188
  %v2190 = vand.u32 %v2189, 4294901760
  %v2191 = vsub.f32 %v2189, %v2190
  %v2192 = vand.u32 %v2191, 4294901760
  %2193 = vmatpush1.msra.mxu0 %v2192
  %2194 = vmatprep.subr.mxu0 0.0
  %v2195 = vand.u32 %v1090, 4294901760
  %v2196 = vsub.f32 %v1090, %v2195
  %v2197 = vand.u32 %v2196, 4294901760
  %v2198 = vsub.f32 %v2196, %v2197
  %v2199 = vand.u32 %v2198, 4294901760
  %2200 = vmatpush1.msra.mxu0 %v2199
  %2201 = vmatprep.subr.mxu0 0.0
  %v2202 = vand.u32 %v1091, 4294901760
  %v2203 = vsub.f32 %v1091, %v2202
  %v2204 = vand.u32 %v2203, 4294901760
  %v2205 = vsub.f32 %v2203, %v2204
  %v2206 = vand.u32 %v2205, 4294901760
  %2207 = vmatpush1.msra.mxu0 %v2206
  %2208 = vmatprep.subr.mxu0 0.0
  %v2209 = vand.u32 %v1092, 4294901760
  %v2210 = vsub.f32 %v1092, %v2209
  %v2211 = vand.u32 %v2210, 4294901760
  %v2212 = vsub.f32 %v2210, %v2211
  %v2213 = vand.u32 %v2212, 4294901760
  %2214 = vmatpush1.msra.mxu0 %v2213
  %2215 = vmatprep.subr.mxu0 0.0
  %v2216 = vand.u32 %v1093, 4294901760
  %v2217 = vsub.f32 %v1093, %v2216
  %v2218 = vand.u32 %v2217, 4294901760
  %v2219 = vsub.f32 %v2217, %v2218
  %v2220 = vand.u32 %v2219, 4294901760
  %2221 = vmatpush1.msra.mxu0 %v2220
  %2222 = vmatprep.subr.mxu0 0.0
  %v2223 = vand.u32 %v1094, 4294901760
  %v2224 = vsub.f32 %v1094, %v2223
  %v2225 = vand.u32 %v2224, 4294901760
  %v2226 = vsub.f32 %v2224, %v2225
  %v2227 = vand.u32 %v2226, 4294901760
  %2228 = vmatpush1.msra.mxu0 %v2227
  %2229 = vmatprep.subr.mxu0 0.0
  %v2230 = vand.u32 %v1095, 4294901760
  %v2231 = vsub.f32 %v1095, %v2230
  %v2232 = vand.u32 %v2231, 4294901760
  %v2233 = vsub.f32 %v2231, %v2232
  %v2234 = vand.u32 %v2233, 4294901760
  %2235 = vmatpush1.msra.mxu0 %v2234
  %2236 = vmatprep.subr.mxu0 0.0
  %v2237 = vand.u32 %v1096, 4294901760
  %v2238 = vsub.f32 %v1096, %v2237
  %v2239 = vand.u32 %v2238, 4294901760
  %v2240 = vsub.f32 %v2238, %v2239
  %v2241 = vand.u32 %v2240, 4294901760
  %2242 = vmatpush1.msra.mxu0 %v2241
  %2243 = vmatprep.subr.mxu0 0.0
  %v2244 = vand.u32 %v1097, 4294901760
  %v2245 = vsub.f32 %v1097, %v2244
  %v2246 = vand.u32 %v2245, 4294901760
  %v2247 = vsub.f32 %v2245, %v2246
  %v2248 = vand.u32 %v2247, 4294901760
  %2249 = vmatpush1.msra.mxu0 %v2248
  %2250 = vmatprep.subr.mxu0 0.0
  %v2251 = vand.u32 %v1098, 4294901760
  %v2252 = vsub.f32 %v1098, %v2251
  %v2253 = vand.u32 %v2252, 4294901760
  %v2254 = vsub.f32 %v2252, %v2253
  %v2255 = vand.u32 %v2254, 4294901760
  %2256 = vmatpush1.msra.mxu0 %v2255
  %2257 = vmatprep.subr.mxu0 0.0
  %v2258 = vand.u32 %v1099, 4294901760
  %v2259 = vsub.f32 %v1099, %v2258
  %v2260 = vand.u32 %v2259, 4294901760
  %v2261 = vsub.f32 %v2259, %v2260
  %v2262 = vand.u32 %v2261, 4294901760
  %2263 = vmatpush1.msra.mxu0 %v2262
  %2264 = vmatprep.subr.mxu0 0.0
  %v2265 = vand.u32 %v1100, 4294901760
  %v2266 = vsub.f32 %v1100, %v2265
  %v2267 = vand.u32 %v2266, 4294901760
  %v2268 = vsub.f32 %v2266, %v2267
  %v2269 = vand.u32 %v2268, 4294901760
  %2270 = vmatpush1.msra.mxu0 %v2269
  %2271 = vmatprep.subr.mxu0 0.0
  %v2272 = vand.u32 %v1101, 4294901760
  %v2273 = vsub.f32 %v1101, %v2272
  %v2274 = vand.u32 %v2273, 4294901760
  %v2275 = vsub.f32 %v2273, %v2274
  %v2276 = vand.u32 %v2275, 4294901760
  %2277 = vmatpush1.msra.mxu0 %v2276
  %2278 = vmatprep.subr.mxu0 0.0
  %v2279 = vand.u32 %v1102, 4294901760
  %v2280 = vsub.f32 %v1102, %v2279
  %v2281 = vand.u32 %v2280, 4294901760
  %v2282 = vsub.f32 %v2280, %v2281
  %v2283 = vand.u32 %v2282, 4294901760
  %2284 = vmatpush1.msra.mxu0 %v2283
  %2285 = vmatprep.subr.mxu0 0.0
  %v2286 = vand.u32 %v1103, 4294901760
  %v2287 = vsub.f32 %v1103, %v2286
  %v2288 = vand.u32 %v2287, 4294901760
  %v2289 = vsub.f32 %v2287, %v2288
  %v2290 = vand.u32 %v2289, 4294901760
  %2291 = vmatpush1.msra.mxu0 %v2290
  %2292 = vmatprep.subr.mxu0 0.0
  %v2293 = vand.u32 %v1104, 4294901760
  %v2294 = vsub.f32 %v1104, %v2293
  %v2295 = vand.u32 %v2294, 4294901760
  %v2296 = vsub.f32 %v2294, %v2295
  %v2297 = vand.u32 %v2296, 4294901760
  %2298 = vmatpush1.msra.mxu0 %v2297
  %2299 = vmatprep.subr.mxu0 0.0
  %v2300 = vand.u32 %v1105, 4294901760
  %v2301 = vsub.f32 %v1105, %v2300
  %v2302 = vand.u32 %v2301, 4294901760
  %v2303 = vsub.f32 %v2301, %v2302
  %v2304 = vand.u32 %v2303, 4294901760
  %2305 = vmatpush1.msra.mxu0 %v2304
  %v2306 = vand.u32 %v1041, 4294901760
  %2307 = vmatprep.mubr.f32.mxu0 %v2306
  %v2308 = vand.u32 %v1040, 4294901760
  %2309 = vmatmul.mubr.f32.gmra.mrb[0].mxu0 %v2308
  %v2310 = vpop.f32.mrb[0].mxu0
  %v2311 = vadd.f32 %v2079, %v2310
  %v2312 = vpop.f32.mrb[0].mxu0
  %2313 = vdwg.mxu0
  %2314 = vmatprep.subr.mxu0 0.0
  %v2315 = vand.u32 %v1074, 4294901760
  %v2316 = vsub.f32 %v1074, %v2315
  %2317 = vmatpush1.msra.mxu0 %v2316
  %2318 = vmatprep.subr.mxu0 0.0
  %v2319 = vand.u32 %v1075, 4294901760
  %v2320 = vsub.f32 %v1075, %v2319
  %2321 = vmatpush1.msra.mxu0 %v2320
  %2322 = vmatprep.subr.mxu0 0.0
  %v2323 = vand.u32 %v1076, 4294901760
  %v2324 = vsub.f32 %v1076, %v2323
  %2325 = vmatpush1.msra.mxu0 %v2324
  %2326 = vmatprep.subr.mxu0 0.0
  %v2327 = vand.u32 %v1077, 4294901760
  %v2328 = vsub.f32 %v1077, %v2327
  %2329 = vmatpush1.msra.mxu0 %v2328
  %2330 = vmatprep.subr.mxu0 0.0
  %v2331 = vand.u32 %v1078, 4294901760
  %v2332 = vsub.f32 %v1078, %v2331
  %2333 = vmatpush1.msra.mxu0 %v2332
  %2334 = vmatprep.subr.mxu0 0.0
  %v2335 = vand.u32 %v1079, 4294901760
  %v2336 = vsub.f32 %v1079, %v2335
  %2337 = vmatpush1.msra.mxu0 %v2336
  %2338 = vmatprep.subr.mxu0 0.0
  %v2339 = vand.u32 %v1080, 4294901760
  %v2340 = vsub.f32 %v1080, %v2339
  %2341 = vmatpush1.msra.mxu0 %v2340
  %2342 = vmatprep.subr.mxu0 0.0
  %v2343 = vand.u32 %v1081, 4294901760
  %v2344 = vsub.f32 %v1081, %v2343
  %2345 = vmatpush1.msra.mxu0 %v2344
  %2346 = vmatprep.subr.mxu0 0.0
  %v2347 = vand.u32 %v1082, 4294901760
  %v2348 = vsub.f32 %v1082, %v2347
  %2349 = vmatpush1.msra.mxu0 %v2348
  %2350 = vmatprep.subr.mxu0 0.0
  %v2351 = vand.u32 %v1083, 4294901760
  %v2352 = vsub.f32 %v1083, %v2351
  %2353 = vmatpush1.msra.mxu0 %v2352
  %2354 = vmatprep.subr.mxu0 0.0
  %v2355 = vand.u32 %v1084, 4294901760
  %v2356 = vsub.f32 %v1084, %v2355
  %2357 = vmatpush1.msra.mxu0 %v2356
  %2358 = vmatprep.subr.mxu0 0.0
  %v2359 = vand.u32 %v1085, 4294901760
  %v2360 = vsub.f32 %v1085, %v2359
  %2361 = vmatpush1.msra.mxu0 %v2360
  %2362 = vmatprep.subr.mxu0 0.0
  %v2363 = vand.u32 %v1086, 4294901760
  %v2364 = vsub.f32 %v1086, %v2363
  %2365 = vmatpush1.msra.mxu0 %v2364
  %2366 = vmatprep.subr.mxu0 0.0
  %v2367 = vand.u32 %v1087, 4294901760
  %v2368 = vsub.f32 %v1087, %v2367
  %2369 = vmatpush1.msra.mxu0 %v2368
  %2370 = vmatprep.subr.mxu0 0.0
  %v2371 = vand.u32 %v1088, 4294901760
  %v2372 = vsub.f32 %v1088, %v2371
  %2373 = vmatpush1.msra.mxu0 %v2372
  %2374 = vmatprep.subr.mxu0 0.0
  %v2375 = vand.u32 %v1089, 4294901760
  %v2376 = vsub.f32 %v1089, %v2375
  %2377 = vmatpush1.msra.mxu0 %v2376
  %2378 = vmatprep.subr.mxu0 0.0
  %v2379 = vand.u32 %v1090, 4294901760
  %v2380 = vsub.f32 %v1090, %v2379
  %2381 = vmatpush1.msra.mxu0 %v2380
  %2382 = vmatprep.subr.mxu0 0.0
  %v2383 = vand.u32 %v1091, 4294901760
  %v2384 = vsub.f32 %v1091, %v2383
  %2385 = vmatpush1.msra.mxu0 %v2384
  %2386 = vmatprep.subr.mxu0 0.0
  %v2387 = vand.u32 %v1092, 4294901760
  %v2388 = vsub.f32 %v1092, %v2387
  %2389 = vmatpush1.msra.mxu0 %v2388
  %2390 = vmatprep.subr.mxu0 0.0
  %v2391 = vand.u32 %v1093, 4294901760
  %v2392 = vsub.f32 %v1093, %v2391
  %2393 = vmatpush1.msra.mxu0 %v2392
  %2394 = vmatprep.subr.mxu0 0.0
  %v2395 = vand.u32 %v1094, 4294901760
  %v2396 = vsub.f32 %v1094, %v2395
  %2397 = vmatpush1.msra.mxu0 %v2396
  %2398 = vmatprep.subr.mxu0 0.0
  %v2399 = vand.u32 %v1095, 4294901760
  %v2400 = vsub.f32 %v1095, %v2399
  %2401 = vmatpush1.msra.mxu0 %v2400
  %2402 = vmatprep.subr.mxu0 0.0
  %v2403 = vand.u32 %v1096, 4294901760
  %v2404 = vsub.f32 %v1096, %v2403
  %2405 = vmatpush1.msra.mxu0 %v2404
  %2406 = vmatprep.subr.mxu0 0.0
  %v2407 = vand.u32 %v1097, 4294901760
  %v2408 = vsub.f32 %v1097, %v2407
  %2409 = vmatpush1.msra.mxu0 %v2408
  %2410 = vmatprep.subr.mxu0 0.0
  %v2411 = vand.u32 %v1098, 4294901760
  %v2412 = vsub.f32 %v1098, %v2411
  %2413 = vmatpush1.msra.mxu0 %v2412
  %2414 = vmatprep.subr.mxu0 0.0
  %v2415 = vand.u32 %v1099, 4294901760
  %v2416 = vsub.f32 %v1099, %v2415
  %2417 = vmatpush1.msra.mxu0 %v2416
  %2418 = vmatprep.subr.mxu0 0.0
  %v2419 = vand.u32 %v1100, 4294901760
  %v2420 = vsub.f32 %v1100, %v2419
  %2421 = vmatpush1.msra.mxu0 %v2420
  %2422 = vmatprep.subr.mxu0 0.0
  %v2423 = vand.u32 %v1101, 4294901760
  %v2424 = vsub.f32 %v1101, %v2423
  %2425 = vmatpush1.msra.mxu0 %v2424
  %2426 = vmatprep.subr.mxu0 0.0
  %v2427 = vand.u32 %v1102, 4294901760
  %v2428 = vsub.f32 %v1102, %v2427
  %2429 = vmatpush1.msra.mxu0 %v2428
  %2430 = vmatprep.subr.mxu0 0.0
  %v2431 = vand.u32 %v1103, 4294901760
  %v2432 = vsub.f32 %v1103, %v2431
  %2433 = vmatpush1.msra.mxu0 %v2432
  %2434 = vmatprep.subr.mxu0 0.0
  %v2435 = vand.u32 %v1104, 4294901760
  %v2436 = vsub.f32 %v1104, %v2435
  %2437 = vmatpush1.msra.mxu0 %v2436
  %2438 = vmatprep.subr.mxu0 0.0
  %v2439 = vand.u32 %v1105, 4294901760
  %v2440 = vsub.f32 %v1105, %v2439
  %2441 = vmatpush1.msra.mxu0 %v2440
  %v2442 = vand.u32 %v1041, 4294901760
  %v2443 = vsub.f32 %v1041, %v2442
  %2444 = vmatprep.mubr.f32.mxu0 %v2443
  %v2445 = vand.u32 %v1040, 4294901760
  %v2446 = vsub.f32 %v1040, %v2445
  %2447 = vmatmul.mubr.f32.gmra.mrb[0].mxu0 %v2446
  %v2448 = vpop.f32.mrb[0].mxu0
  %v2449 = vadd.f32 %v2311, %v2448
  %v2450 = vpop.f32.mrb[0].mxu0
  %2451 = vdwg.mxu0
  %2452 = vmatprep.subr.mxu0 0.0
  %v2453 = vand.u32 %v1074, 4294901760
  %2454 = vmatpush1.msra.mxu0 %v2453
  %2455 = vmatprep.subr.mxu0 0.0
  %v2456 = vand.u32 %v1075, 4294901760
  %2457 = vmatpush1.msra.mxu0 %v2456
  %2458 = vmatprep.subr.mxu0 0.0
  %v2459 = vand.u32 %v1076, 4294901760
  %2460 = vmatpush1.msra.mxu0 %v2459
  %2461 = vmatprep.subr.mxu0 0.0
  %v2462 = vand.u32 %v1077, 4294901760
  %2463 = vmatpush1.msra.mxu0 %v2462
  %2464 = vmatprep.subr.mxu0 0.0
  %v2465 = vand.u32 %v1078, 4294901760
  %2466 = vmatpush1.msra.mxu0 %v2465
  %2467 = vmatprep.subr.mxu0 0.0
  %v2468 = vand.u32 %v1079, 4294901760
  %2469 = vmatpush1.msra.mxu0 %v2468
  %2470 = vmatprep.subr.mxu0 0.0
  %v2471 = vand.u32 %v1080, 4294901760
  %2472 = vmatpush1.msra.mxu0 %v2471
  %2473 = vmatprep.subr.mxu0 0.0
  %v2474 = vand.u32 %v1081, 4294901760
  %2475 = vmatpush1.msra.mxu0 %v2474
  %2476 = vmatprep.subr.mxu0 0.0
  %v2477 = vand.u32 %v1082, 4294901760
  %2478 = vmatpush1.msra.mxu0 %v2477
  %2479 = vmatprep.subr.mxu0 0.0
  %v2480 = vand.u32 %v1083, 4294901760
  %2481 = vmatpush1.msra.mxu0 %v2480
  %2482 = vmatprep.subr.mxu0 0.0
  %v2483 = vand.u32 %v1084, 4294901760
  %2484 = vmatpush1.msra.mxu0 %v2483
  %2485 = vmatprep.subr.mxu0 0.0
  %v2486 = vand.u32 %v1085, 4294901760
  %2487 = vmatpush1.msra.mxu0 %v2486
  %2488 = vmatprep.subr.mxu0 0.0
  %v2489 = vand.u32 %v1086, 4294901760
  %2490 = vmatpush1.msra.mxu0 %v2489
  %2491 = vmatprep.subr.mxu0 0.0
  %v2492 = vand.u32 %v1087, 4294901760
  %2493 = vmatpush1.msra.mxu0 %v2492
  %2494 = vmatprep.subr.mxu0 0.0
  %v2495 = vand.u32 %v1088, 4294901760
  %2496 = vmatpush1.msra.mxu0 %v2495
  %2497 = vmatprep.subr.mxu0 0.0
  %v2498 = vand.u32 %v1089, 4294901760
  %2499 = vmatpush1.msra.mxu0 %v2498
  %2500 = vmatprep.subr.mxu0 0.0
  %v2501 = vand.u32 %v1090, 4294901760
  %2502 = vmatpush1.msra.mxu0 %v2501
  %2503 = vmatprep.subr.mxu0 0.0
  %v2504 = vand.u32 %v1091, 4294901760
  %2505 = vmatpush1.msra.mxu0 %v2504
  %2506 = vmatprep.subr.mxu0 0.0
  %v2507 = vand.u32 %v1092, 4294901760
  %2508 = vmatpush1.msra.mxu0 %v2507
  %2509 = vmatprep.subr.mxu0 0.0
  %v2510 = vand.u32 %v1093, 4294901760
  %2511 = vmatpush1.msra.mxu0 %v2510
  %2512 = vmatprep.subr.mxu0 0.0
  %v2513 = vand.u32 %v1094, 4294901760
  %2514 = vmatpush1.msra.mxu0 %v2513
  %2515 = vmatprep.subr.mxu0 0.0
  %v2516 = vand.u32 %v1095, 4294901760
  %2517 = vmatpush1.msra.mxu0 %v2516
  %2518 = vmatprep.subr.mxu0 0.0
  %v2519 = vand.u32 %v1096, 4294901760
  %2520 = vmatpush1.msra.mxu0 %v2519
  %2521 = vmatprep.subr.mxu0 0.0
  %v2522 = vand.u32 %v1097, 4294901760
  %2523 = vmatpush1.msra.mxu0 %v2522
  %2524 = vmatprep.subr.mxu0 0.0
  %v2525 = vand.u32 %v1098, 4294901760
  %2526 = vmatpush1.msra.mxu0 %v2525
  %2527 = vmatprep.subr.mxu0 0.0
  %v2528 = vand.u32 %v1099, 4294901760
  %2529 = vmatpush1.msra.mxu0 %v2528
  %2530 = vmatprep.subr.mxu0 0.0
  %v2531 = vand.u32 %v1100, 4294901760
  %2532 = vmatpush1.msra.mxu0 %v2531
  %2533 = vmatprep.subr.mxu0 0.0
  %v2534 = vand.u32 %v1101, 4294901760
  %2535 = vmatpush1.msra.mxu0 %v2534
  %2536 = vmatprep.subr.mxu0 0.0
  %v2537 = vand.u32 %v1102, 4294901760
  %2538 = vmatpush1.msra.mxu0 %v2537
  %2539 = vmatprep.subr.mxu0 0.0
  %v2540 = vand.u32 %v1103, 4294901760
  %2541 = vmatpush1.msra.mxu0 %v2540
  %2542 = vmatprep.subr.mxu0 0.0
  %v2543 = vand.u32 %v1104, 4294901760
  %2544 = vmatpush1.msra.mxu0 %v2543
  %2545 = vmatprep.subr.mxu0 0.0
  %v2546 = vand.u32 %v1105, 4294901760
  %2547 = vmatpush1.msra.mxu0 %v2546
  %v2548 = vand.u32 %v1041, 4294901760
  %v2549 = vsub.f32 %v1041, %v2548
  %v2550 = vand.u32 %v2549, 4294901760
  %2551 = vmatprep.mubr.f32.mxu0 %v2550
  %v2552 = vand.u32 %v1040, 4294901760
  %v2553 = vsub.f32 %v1040, %v2552
  %v2554 = vand.u32 %v2553, 4294901760
  %2555 = vmatmul.mubr.f32.gmra.mrb[0].mxu0 %v2554
  %v2556 = vpop.f32.mrb[0].mxu0
  %v2557 = vadd.f32 %v2449, %v2556
  %v2558 = vpop.f32.mrb[0].mxu0
  %2559 = vdwg.mxu0
  %2560 = vmatprep.subr.mxu0 0.0
  %v2561 = vand.u32 %v1074, 4294901760
  %v2562 = vsub.f32 %v1074, %v2561
  %v2563 = vand.u32 %v2562, 4294901760
  %2564 = vmatpush1.msra.mxu0 %v2563
  %2565 = vmatprep.subr.mxu0 0.0
  %v2566 = vand.u32 %v1075, 4294901760
  %v2567 = vsub.f32 %v1075, %v2566
  %v2568 = vand.u32 %v2567, 4294901760
  %2569 = vmatpush1.msra.mxu0 %v2568
  %2570 = vmatprep.subr.mxu0 0.0
  %v2571 = vand.u32 %v1076, 4294901760
  %v2572 = vsub.f32 %v1076, %v2571
  %v2573 = vand.u32 %v2572, 4294901760
  %2574 = vmatpush1.msra.mxu0 %v2573
  %2575 = vmatprep.subr.mxu0 0.0
  %v2576 = vand.u32 %v1077, 4294901760
  %v2577 = vsub.f32 %v1077, %v2576
  %v2578 = vand.u32 %v2577, 4294901760
  %2579 = vmatpush1.msra.mxu0 %v2578
  %2580 = vmatprep.subr.mxu0 0.0
  %v2581 = vand.u32 %v1078, 4294901760
  %v2582 = vsub.f32 %v1078, %v2581
  %v2583 = vand.u32 %v2582, 4294901760
  %2584 = vmatpush1.msra.mxu0 %v2583
  %2585 = vmatprep.subr.mxu0 0.0
  %v2586 = vand.u32 %v1079, 4294901760
  %v2587 = vsub.f32 %v1079, %v2586
  %v2588 = vand.u32 %v2587, 4294901760
  %2589 = vmatpush1.msra.mxu0 %v2588
  %2590 = vmatprep.subr.mxu0 0.0
  %v2591 = vand.u32 %v1080, 4294901760
  %v2592 = vsub.f32 %v1080, %v2591
  %v2593 = vand.u32 %v2592, 4294901760
  %2594 = vmatpush1.msra.mxu0 %v2593
  %2595 = vmatprep.subr.mxu0 0.0
  %v2596 = vand.u32 %v1081, 4294901760
  %v2597 = vsub.f32 %v1081, %v2596
  %v2598 = vand.u32 %v2597, 4294901760
  %2599 = vmatpush1.msra.mxu0 %v2598
  %2600 = vmatprep.subr.mxu0 0.0
  %v2601 = vand.u32 %v1082, 4294901760
  %v2602 = vsub.f32 %v1082, %v2601
  %v2603 = vand.u32 %v2602, 4294901760
  %2604 = vmatpush1.msra.mxu0 %v2603
  %2605 = vmatprep.subr.mxu0 0.0
  %v2606 = vand.u32 %v1083, 4294901760
  %v2607 = vsub.f32 %v1083, %v2606
  %v2608 = vand.u32 %v2607, 4294901760
  %2609 = vmatpush1.msra.mxu0 %v2608
  %2610 = vmatprep.subr.mxu0 0.0
  %v2611 = vand.u32 %v1084, 4294901760
  %v2612 = vsub.f32 %v1084, %v2611
  %v2613 = vand.u32 %v2612, 4294901760
  %2614 = vmatpush1.msra.mxu0 %v2613
  %2615 = vmatprep.subr.mxu0 0.0
  %v2616 = vand.u32 %v1085, 4294901760
  %v2617 = vsub.f32 %v1085, %v2616
  %v2618 = vand.u32 %v2617, 4294901760
  %2619 = vmatpush1.msra.mxu0 %v2618
  %2620 = vmatprep.subr.mxu0 0.0
  %v2621 = vand.u32 %v1086, 4294901760
  %v2622 = vsub.f32 %v1086, %v2621
  %v2623 = vand.u32 %v2622, 4294901760
  %2624 = vmatpush1.msra.mxu0 %v2623
  %2625 = vmatprep.subr.mxu0 0.0
  %v2626 = vand.u32 %v1087, 4294901760
  %v2627 = vsub.f32 %v1087, %v2626
  %v2628 = vand.u32 %v2627, 4294901760
  %2629 = vmatpush1.msra.mxu0 %v2628
  %2630 = vmatprep.subr.mxu0 0.0
  %v2631 = vand.u32 %v1088, 4294901760
  %v2632 = vsub.f32 %v1088, %v2631
  %v2633 = vand.u32 %v2632, 4294901760
  %2634 = vmatpush1.msra.mxu0 %v2633
  %2635 = vmatprep.subr.mxu0 0.0
  %v2636 = vand.u32 %v1089, 4294901760
  %v2637 = vsub.f32 %v1089, %v2636
  %v2638 = vand.u32 %v2637, 4294901760
  %2639 = vmatpush1.msra.mxu0 %v2638
  %2640 = vmatprep.subr.mxu0 0.0
  %v2641 = vand.u32 %v1090, 4294901760
  %v2642 = vsub.f32 %v1090, %v2641
  %v2643 = vand.u32 %v2642, 4294901760
  %2644 = vmatpush1.msra.mxu0 %v2643
  %2645 = vmatprep.subr.mxu0 0.0
  %v2646 = vand.u32 %v1091, 4294901760
  %v2647 = vsub.f32 %v1091, %v2646
  %v2648 = vand.u32 %v2647, 4294901760
  %2649 = vmatpush1.msra.mxu0 %v2648
  %2650 = vmatprep.subr.mxu0 0.0
  %v2651 = vand.u32 %v1092, 4294901760
  %v2652 = vsub.f32 %v1092, %v2651
  %v2653 = vand.u32 %v2652, 4294901760
  %2654 = vmatpush1.msra.mxu0 %v2653
  %2655 = vmatprep.subr.mxu0 0.0
  %v2656 = vand.u32 %v1093, 4294901760
  %v2657 = vsub.f32 %v1093, %v2656
  %v2658 = vand.u32 %v2657, 4294901760
  %2659 = vmatpush1.msra.mxu0 %v2658
  %2660 = vmatprep.subr.mxu0 0.0
  %v2661 = vand.u32 %v1094, 4294901760
  %v2662 = vsub.f32 %v1094, %v2661
  %v2663 = vand.u32 %v2662, 4294901760
  %2664 = vmatpush1.msra.mxu0 %v2663
  %2665 = vmatprep.subr.mxu0 0.0
  %v2666 = vand.u32 %v1095, 4294901760
  %v2667 = vsub.f32 %v1095, %v2666
  %v2668 = vand.u32 %v2667, 4294901760
  %2669 = vmatpush1.msra.mxu0 %v2668
  %2670 = vmatprep.subr.mxu0 0.0
  %v2671 = vand.u32 %v1096, 4294901760
  %v2672 = vsub.f32 %v1096, %v2671
  %v2673 = vand.u32 %v2672, 4294901760
  %2674 = vmatpush1.msra.mxu0 %v2673
  %2675 = vmatprep.subr.mxu0 0.0
  %v2676 = vand.u32 %v1097, 4294901760
  %v2677 = vsub.f32 %v1097, %v2676
  %v2678 = vand.u32 %v2677, 4294901760
  %2679 = vmatpush1.msra.mxu0 %v2678
  %2680 = vmatprep.subr.mxu0 0.0
  %v2681 = vand.u32 %v1098, 4294901760
  %v2682 = vsub.f32 %v1098, %v2681
  %v2683 = vand.u32 %v2682, 4294901760
  %2684 = vmatpush1.msra.mxu0 %v2683
  %2685 = vmatprep.subr.mxu0 0.0
  %v2686 = vand.u32 %v1099, 4294901760
  %v2687 = vsub.f32 %v1099, %v2686
  %v2688 = vand.u32 %v2687, 4294901760
  %2689 = vmatpush1.msra.mxu0 %v2688
  %2690 = vmatprep.subr.mxu0 0.0
  %v2691 = vand.u32 %v1100, 4294901760
  %v2692 = vsub.f32 %v1100, %v2691
  %v2693 = vand.u32 %v2692, 4294901760
  %2694 = vmatpush1.msra.mxu0 %v2693
  %2695 = vmatprep.subr.mxu0 0.0
  %v2696 = vand.u32 %v1101, 4294901760
  %v2697 = vsub.f32 %v1101, %v2696
  %v2698 = vand.u32 %v2697, 4294901760
  %2699 = vmatpush1.msra.mxu0 %v2698
  %2700 = vmatprep.subr.mxu0 0.0
  %v2701 = vand.u32 %v1102, 4294901760
  %v2702 = vsub.f32 %v1102, %v2701
  %v2703 = vand.u32 %v2702, 4294901760
  %2704 = vmatpush1.msra.mxu0 %v2703
  %2705 = vmatprep.subr.mxu0 0.0
  %v2706 = vand.u32 %v1103, 4294901760
  %v2707 = vsub.f32 %v1103, %v2706
  %v2708 = vand.u32 %v2707, 4294901760
  %2709 = vmatpush1.msra.mxu0 %v2708
  %2710 = vmatprep.subr.mxu0 0.0
  %v2711 = vand.u32 %v1104, 4294901760
  %v2712 = vsub.f32 %v1104, %v2711
  %v2713 = vand.u32 %v2712, 4294901760
  %2714 = vmatpush1.msra.mxu0 %v2713
  %2715 = vmatprep.subr.mxu0 0.0
  %v2716 = vand.u32 %v1105, 4294901760
  %v2717 = vsub.f32 %v1105, %v2716
  %v2718 = vand.u32 %v2717, 4294901760
  %2719 = vmatpush1.msra.mxu0 %v2718
  %v2720 = vand.u32 %v1041, 4294901760
  %2721 = vmatprep.mubr.f32.mxu0 %v2720
  %v2722 = vand.u32 %v1040, 4294901760
  %2723 = vmatmul.mubr.f32.gmra.mrb[0].mxu0 %v2722
  %v2724 = vpop.f32.mrb[0].mxu0
  %v2725 = vadd.f32 %v2557, %v2724
  %v2726 = vpop.f32.mrb[0].mxu0
  %2727 = vdwg.mxu0
  %2728 = vmatprep.subr.mxu0 0.0
  %v2729 = vand.u32 %v1074, 4294901760
  %2730 = vmatpush1.msra.mxu0 %v2729
  %2731 = vmatprep.subr.mxu0 0.0
  %v2732 = vand.u32 %v1075, 4294901760
  %2733 = vmatpush1.msra.mxu0 %v2732
  %2734 = vmatprep.subr.mxu0 0.0
  %v2735 = vand.u32 %v1076, 4294901760
  %2736 = vmatpush1.msra.mxu0 %v2735
  %2737 = vmatprep.subr.mxu0 0.0
  %v2738 = vand.u32 %v1077, 4294901760
  %2739 = vmatpush1.msra.mxu0 %v2738
  %2740 = vmatprep.subr.mxu0 0.0
  %v2741 = vand.u32 %v1078, 4294901760
  %2742 = vmatpush1.msra.mxu0 %v2741
  %2743 = vmatprep.subr.mxu0 0.0
  %v2744 = vand.u32 %v1079, 4294901760
  %2745 = vmatpush1.msra.mxu0 %v2744
  %2746 = vmatprep.subr.mxu0 0.0
  %v2747 = vand.u32 %v1080, 4294901760
  %2748 = vmatpush1.msra.mxu0 %v2747
  %2749 = vmatprep.subr.mxu0 0.0
  %v2750 = vand.u32 %v1081, 4294901760
  %2751 = vmatpush1.msra.mxu0 %v2750
  %2752 = vmatprep.subr.mxu0 0.0
  %v2753 = vand.u32 %v1082, 4294901760
  %2754 = vmatpush1.msra.mxu0 %v2753
  %2755 = vmatprep.subr.mxu0 0.0
  %v2756 = vand.u32 %v1083, 4294901760
  %2757 = vmatpush1.msra.mxu0 %v2756
  %2758 = vmatprep.subr.mxu0 0.0
  %v2759 = vand.u32 %v1084, 4294901760
  %2760 = vmatpush1.msra.mxu0 %v2759
  %2761 = vmatprep.subr.mxu0 0.0
  %v2762 = vand.u32 %v1085, 4294901760
  %2763 = vmatpush1.msra.mxu0 %v2762
  %2764 = vmatprep.subr.mxu0 0.0
  %v2765 = vand.u32 %v1086, 4294901760
  %2766 = vmatpush1.msra.mxu0 %v2765
  %2767 = vmatprep.subr.mxu0 0.0
  %v2768 = vand.u32 %v1087, 4294901760
  %2769 = vmatpush1.msra.mxu0 %v2768
  %2770 = vmatprep.subr.mxu0 0.0
  %v2771 = vand.u32 %v1088, 4294901760
  %2772 = vmatpush1.msra.mxu0 %v2771
  %2773 = vmatprep.subr.mxu0 0.0
  %v2774 = vand.u32 %v1089, 4294901760
  %2775 = vmatpush1.msra.mxu0 %v2774
  %2776 = vmatprep.subr.mxu0 0.0
  %v2777 = vand.u32 %v1090, 4294901760
  %2778 = vmatpush1.msra.mxu0 %v2777
  %2779 = vmatprep.subr.mxu0 0.0
  %v2780 = vand.u32 %v1091, 4294901760
  %2781 = vmatpush1.msra.mxu0 %v2780
  %2782 = vmatprep.subr.mxu0 0.0
  %v2783 = vand.u32 %v1092, 4294901760
  %2784 = vmatpush1.msra.mxu0 %v2783
  %2785 = vmatprep.subr.mxu0 0.0
  %v2786 = vand.u32 %v1093, 4294901760
  %2787 = vmatpush1.msra.mxu0 %v2786
  %2788 = vmatprep.subr.mxu0 0.0
  %v2789 = vand.u32 %v1094, 4294901760
  %2790 = vmatpush1.msra.mxu0 %v2789
  %2791 = vmatprep.subr.mxu0 0.0
  %v2792 = vand.u32 %v1095, 4294901760
  %2793 = vmatpush1.msra.mxu0 %v2792
  %2794 = vmatprep.subr.mxu0 0.0
  %v2795 = vand.u32 %v1096, 4294901760
  %2796 = vmatpush1.msra.mxu0 %v2795
  %2797 = vmatprep.subr.mxu0 0.0
  %v2798 = vand.u32 %v1097, 4294901760
  %2799 = vmatpush1.msra.mxu0 %v2798
  %2800 = vmatprep.subr.mxu0 0.0
  %v2801 = vand.u32 %v1098, 4294901760
  %2802 = vmatpush1.msra.mxu0 %v2801
  %2803 = vmatprep.subr.mxu0 0.0
  %v2804 = vand.u32 %v1099, 4294901760
  %2805 = vmatpush1.msra.mxu0 %v2804
  %2806 = vmatprep.subr.mxu0 0.0
  %v2807 = vand.u32 %v1100, 4294901760
  %2808 = vmatpush1.msra.mxu0 %v2807
  %2809 = vmatprep.subr.mxu0 0.0
  %v2810 = vand.u32 %v1101, 4294901760
  %2811 = vmatpush1.msra.mxu0 %v2810
  %2812 = vmatprep.subr.mxu0 0.0
  %v2813 = vand.u32 %v1102, 4294901760
  %2814 = vmatpush1.msra.mxu0 %v2813
  %2815 = vmatprep.subr.mxu0 0.0
  %v2816 = vand.u32 %v1103, 4294901760
  %2817 = vmatpush1.msra.mxu0 %v2816
  %2818 = vmatprep.subr.mxu0 0.0
  %v2819 = vand.u32 %v1104, 4294901760
  %2820 = vmatpush1.msra.mxu0 %v2819
  %2821 = vmatprep.subr.mxu0 0.0
  %v2822 = vand.u32 %v1105, 4294901760
  %2823 = vmatpush1.msra.mxu0 %v2822
  %v2824 = vand.u32 %v1041, 4294901760
  %2825 = vmatprep.mubr.f32.mxu0 %v2824
  %v2826 = vand.u32 %v1040, 4294901760
  %2827 = vmatmul.mubr.f32.gmra.mrb[0].mxu0 %v2826
  %v2828 = vpop.f32.mrb[0].mxu0
  %v2829 = vadd.f32 %v2725, %v2828
  %v2830 = vpop.f32.mrb[0].mxu0
  %2831 = vdwg.mxu0
  %vm2832 = vcmask 3072
  %2833 = vst.msk [vmem:[%s5] sm:$0xf] %vm2832, %v2829
  // Predicated region
  $region22: #{simple_nn_forward.1} parent=0 // pred_check
    _
  $region23: #{simple_nn_forward.1} parent=0 // pred_check_branch
    %2835 = sbr.rel (0) target = $region25
  $region24: #{simple_nn_forward.1} parent=0 // pred_region
    _
  $region25: #{simple_nn_forward.1} parent=0 // pred_fallthru
    _
  // Predicated region
  $region26: #{simple_nn_forward.1} parent=0 // pred_check
    _
  $region27: #{simple_nn_forward.1} parent=0 // pred_check_branch
    %2837 = sbr.rel (0) target = $region29
  $region28: #{simple_nn_forward.1} parent=0 // pred_region
    _
  $region29: #{simple_nn_forward.1} parent=0 // pred_fallthru
    _

</llo_original>
